<compile_context>
chip_gen: v7x
topology: tpu7x:2x2x1
jax: 0.10.0
libtpu: 0.0.40
codegen_flags: <defaults>
</compile_context>

<pallas_src>
import math

import jax
import jax.numpy as jnp
from jax.experimental import pallas as pl
from jax.experimental.pallas import tpu as pltpu

# --- model hyper-parameters (small, consistent with the module) -------------
D_MODEL = 32
N_HEAD = 4
D_HEAD = D_MODEL // N_HEAD
FFN_HIDDEN = 64
EPS = 1e-12       # LayerNorm eps from the module
LANE = 128        # TPU lane width; feature axis padded to this

# rows of the packed small-parameter array (one (16, 128) f32 input)
PP_BQ, PP_BK, PP_BV, PP_BO = 0, 1, 2, 3
PP_G1, PP_BE1 = 4, 5
PP_B1, PP_B2 = 6, 7
PP_G2, PP_BE2 = 8, 9
PP_HM = 10                 # 4 head-mask rows: ones on lanes [h*DH, (h+1)*DH)
PP_ROWS = 16


def _layernorm_padded(xp, gamma, beta, d_real):
    """LayerNorm over the first `d_real` lanes of a zero-padded (N, 128) slab.

    Uses E[x^2] - mean^2 so the zero padding never pollutes the statistics;
    gamma/beta are zero on padded lanes, so padded lanes stay exactly 0.
    """
    inv_d = 1.0 / d_real
    s1 = jnp.sum(xp, axis=-1, keepdims=True)
    s2 = jnp.sum(xp * xp, axis=-1, keepdims=True)
    mean = s1 * inv_d
    var = jnp.maximum(s2 * inv_d - mean * mean, 0.0)
    inv = jax.lax.rsqrt(var + EPS)
    return (xp - mean) * inv * gamma + beta


def _make_kernel(bt, s):
    """Kernel body for one grid step over a (bt*s, 128) padded activation slab."""
    BS = bt * s
    H, D = N_HEAD, D_MODEL

    def kernel(x_ref, bias_ref, wqkv_ref, wo_ref, w1_ref, w2_ref, pp_ref, out_ref):
        x = x_ref[...]                                   # (BS, 128) lane-dense
        bias = bias_ref[...].reshape(bt, s, s)           # additive mask (0 / -1e4)

        # --- fused QKV projection: one MXU matmul, 128-aligned column blocks ---
        qkv = jnp.dot(x, wqkv_ref[...], preferred_element_type=jnp.float32)  # (BS, 384)
        q = (qkv[:, 0:LANE]          + pp_ref[PP_BQ:PP_BQ + 1, :]).reshape(bt, s, LANE)
        k = (qkv[:, LANE:2 * LANE]   + pp_ref[PP_BK:PP_BK + 1, :]).reshape(bt, s, LANE)
        v = (qkv[:, 2 * LANE:3 * LANE] + pp_ref[PP_BV:PP_BV + 1, :]).reshape(bt, s, LANE)

        # --- multi-head self-attention (heads via disjoint lane masks) ---------
        # scale 1/sqrt(d_head) is folded into Wq/bq wrapper-side.
        ctx = jnp.zeros((bt, s, LANE), jnp.float32)
        for h in range(H):                                # static unroll, H=4
            hm = pp_ref[PP_HM + h:PP_HM + h + 1, :].reshape(1, 1, LANE)
            scores = jnp.einsum('bqd,bkd->bqk', q, k * hm,
                                preferred_element_type=jnp.float32) + bias
            m = jnp.max(scores, axis=-1, keepdims=True)
            e = jnp.exp(scores - m)
            inv = pl.reciprocal(jnp.sum(e, axis=-1, keepdims=True), approx=False)
            # normalize after the PV matmul; disjoint lane masks make the
            # per-head accumulation equal to the head concat (no relayout).
            ctx = ctx + jnp.einsum('bqk,bkd->bqd', e, v * hm,
                                   preferred_element_type=jnp.float32) * inv

        attn = jnp.dot(ctx.reshape(BS, LANE), wo_ref[...],
                       preferred_element_type=jnp.float32) + pp_ref[PP_BO:PP_BO + 1, :]

        # dropout1: identity in eval mode
        x1 = _layernorm_padded(attn + x,
                               pp_ref[PP_G1:PP_G1 + 1, :],
                               pp_ref[PP_BE1:PP_BE1 + 1, :], D)

        # --- position-wise feed-forward ----------------------------------------
        h1 = jnp.maximum(jnp.dot(x1, w1_ref[...], preferred_element_type=jnp.float32)
                         + pp_ref[PP_B1:PP_B1 + 1, :], 0.0)
        # ffn-internal dropout: identity in eval mode
        f = jnp.dot(h1, w2_ref[...], preferred_element_type=jnp.float32) \
            + pp_ref[PP_B2:PP_B2 + 1, :]

        # dropout2: identity in eval mode; lane-dense (128-wide) unmasked store
        out_ref[...] = _layernorm_padded(f + x1,
                                         pp_ref[PP_G2:PP_G2 + 1, :],
                                         pp_ref[PP_BE2:PP_BE2 + 1, :],
                                         D).astype(out_ref.dtype)

    return kernel


def encoder_layer(x, src_mask, params, *, batch_block=None):
    """x: (B, S, D) f32; src_mask: (B, S, S) f32 (1=keep, 0=mask).

    batch_block: batches per grid step.  Default B -> grid=(1,) (best for the
    single-TensorCore v5e/v6e).  On v7x pass batch_block=B//2 so the two
    TensorCores each take half the batch (dimension_semantics='parallel').
    """
    B, S, D = x.shape
    assert D == D_MODEL
    bt = B if batch_block is None else batch_block
    assert B % bt == 0
    nb = B // bt

    (wq, bq, wk, bk, wv, bv, wo, bo,
     g1, be1, w1, b1, w2, b2, g2, be2) = params

    # ---- wrapper-side parameter prep (outside the kernel) -------------------
    scale = 1.0 / math.sqrt(D_HEAD)

    # fused QKV weight, zero-padded so q/k/v sit at 128-aligned column blocks
    wqkv = jnp.zeros((LANE, 3 * LANE), jnp.float32)
    wqkv = wqkv.at[:D, 0:D].set(wq * scale)
    wqkv = wqkv.at[:D, LANE:LANE + D].set(wk)
    wqkv = wqkv.at[:D, 2 * LANE:2 * LANE + D].set(wv)

    wo_pad = jnp.zeros((LANE, LANE), jnp.float32).at[:D, :D].set(wo)
    w1_pad = jnp.zeros((LANE, LANE), jnp.float32).at[:D, :FFN_HIDDEN].set(w1)
    w2_pad = jnp.zeros((LANE, LANE), jnp.float32).at[:FFN_HIDDEN, :D].set(w2)

    # all tiny row-params packed into one (16, 128) array (one DMA descriptor)
    pp = jnp.zeros((PP_ROWS, LANE), jnp.float32)
    pp = pp.at[PP_BQ, :D].set((bq * scale)[0])
    pp = pp.at[PP_BK, :D].set(bk[0])
    pp = pp.at[PP_BV, :D].set(bv[0])
    pp = pp.at[PP_BO, :D].set(bo[0])
    pp = pp.at[PP_G1, :D].set(g1[0])
    pp = pp.at[PP_BE1, :D].set(be1[0])
    pp = pp.at[PP_B1, :FFN_HIDDEN].set(b1[0])
    pp = pp.at[PP_B2, :D].set(b2[0])
    pp = pp.at[PP_G2, :D].set(g2[0])
    pp = pp.at[PP_BE2, :D].set(be2[0])
    for h in range(N_HEAD):
        pp = pp.at[PP_HM + h, h * D_HEAD:(h + 1) * D_HEAD].set(1.0)

    # lane-dense activations: fold batch*seq into sublanes, pad features to 128
    x_pad = jnp.pad(x.reshape(B * S, D), ((0, 0), (0, LANE - D)))

    # additive mask bias: 0 where visible, -10000 where masked (2-D slab)
    mask_bias = ((src_mask.astype(jnp.float32) - 1.0) * 10000.0).reshape(B * S, S)

    out_pad = pl.pallas_call(
        _make_kernel(bt, S),
        out_shape=jax.ShapeDtypeStruct((B * S, LANE), jnp.float32),
        grid=(nb,),
        in_specs=[
            pl.BlockSpec((bt * S, LANE), lambda i: (i, 0)),        # activations
            pl.BlockSpec((bt * S, S), lambda i: (i, 0)),           # additive mask
            pl.BlockSpec((LANE, 3 * LANE), lambda i: (0, 0)),      # fused Wqkv
            pl.BlockSpec((LANE, LANE), lambda i: (0, 0)),          # Wo
            pl.BlockSpec((LANE, LANE), lambda i: (0, 0)),          # W1
            pl.BlockSpec((LANE, LANE), lambda i: (0, 0)),          # W2
            pl.BlockSpec((PP_ROWS, LANE), lambda i: (0, 0)),       # packed params
        ],
        out_specs=pl.BlockSpec((bt * S, LANE), lambda i: (i, 0)),
        compiler_params=pltpu.CompilerParams(
            dimension_semantics=("parallel",),        # independent batch blocks
            vmem_limit_bytes=32 * 1024 * 1024),       # explicit; safe on v5e..v7x
    )(x_pad, mask_bias, wqkv, wo_pad, w1_pad, w2_pad, pp)

    return out_pad[:, :D].reshape(B, S, D)


# ----------------------------- reference (pure JAX) --------------------------
def _layernorm_ref(x, gamma, beta):
    mean = jnp.mean(x, axis=-1, keepdims=True)
    var = jnp.mean((x - mean) ** 2, axis=-1, keepdims=True)
    inv = jax.lax.rsqrt(var + EPS)
    return (x - mean) * inv * gamma + beta


def encoder_layer_ref(x, mask, params):
    (wq, bq, wk, bk, wv, bv, wo, bo, g1, be1, w1, b1, w2, b2, g2, be2) = params
    B, S, D = x.shape

    def split(t):   # (B,S,D) -> (B,H,S,dh)
        return t.reshape(B, S, N_HEAD, D_HEAD).transpose(0, 2, 1, 3)

    q, k, v = x @ wq + bq, x @ wk + bk, x @ wv + bv
    qh, kh, vh = split(q), split(k), split(v)
    scores = jnp.einsum('bhqd,bhkd->bhqk', qh, kh) / math.sqrt(D_HEAD)
    scores = jnp.where(mask[:, None, :, :] == 0, -10000.0, scores)
    p = jax.nn.softmax(scores, axis=-1)
    ctx = jnp.einsum('bhqk,bhkd->bhqd', p, vh).transpose(0, 2, 1, 3).reshape(B, S, D)
    attn_out = ctx @ wo + bo

    x1 = _layernorm_ref(attn_out + x, g1, be1)
    h1 = jnp.maximum(x1 @ w1 + b1, 0.0)
    f = h1 @ w2 + b2
    return _layernorm_ref(f + x1, g2, be2)


# ----------------------------- parameter init --------------------------------
def init_params(key):
    def linear(k, fan_in, fan_out):
        k1, k2 = jax.random.split(k)
        bound = 1.0 / math.sqrt(fan_in)
        w = jax.random.uniform(k1, (fan_in, fan_out), jnp.float32, -bound, bound)
        b = jax.random.uniform(k2, (1, fan_out), jnp.float32, -bound, bound)
        return w, b

    ks = jax.random.split(key, 6)
    wq, bq = linear(ks[0], D_MODEL, D_MODEL)
    wk, bk = linear(ks[1], D_MODEL, D_MODEL)
    wv, bv = linear(ks[2], D_MODEL, D_MODEL)
    wo, bo = linear(ks[3], D_MODEL, D_MODEL)
    w1, b1 = linear(ks[4], D_MODEL, FFN_HIDDEN)
    w2, b2 = linear(ks[5], FFN_HIDDEN, D_MODEL)
    g1 = jnp.ones((1, D_MODEL), jnp.float32)
    be1 = jnp.zeros((1, D_MODEL), jnp.float32)
    g2 = jnp.ones((1, D_MODEL), jnp.float32)
    be2 = jnp.zeros((1, D_MODEL), jnp.float32)
    return (wq, bq, wk, bk, wv, bv, wo, bo,
            g1, be1, w1, b1, w2, b2, g2, be2)


if __name__ == "__main__":
    B, S = 2, 8
    key = jax.random.PRNGKey(0)
    kx, kp = jax.random.split(key)

    x = jax.random.normal(kx, (B, S, D_MODEL), jnp.float32)
    # src_mask: batch 0 fully visible; batch 1 has its last 2 key positions masked
    src_mask = jnp.ones((B, S, S), jnp.float32)
    src_mask = src_mask.at[1, :, S - 2:].set(0.0)

    params = init_params(kp)

    out = encoder_layer(x, src_mask, params)
    out = jax.block_until_ready(out)

    ref = encoder_layer_ref(x, src_mask, params)
    assert out.shape == (B, S, D_MODEL)
    assert jnp.allclose(out, ref, atol=1e-4, rtol=1e-4), "mismatch vs. reference"

    print("KERNEL_OK")
</pallas_src>

<mosaic_0001>
module attributes {stable_mosaic.version = 11 : i64} {
  func.func @kernel(%arg0: i32, %arg1: memref<16x128xf32, #tpu.memory_space<vmem>>, %arg2: memref<16x8xf32, #tpu.memory_space<vmem>>, %arg3: memref<128x384xf32, #tpu.memory_space<vmem>>, %arg4: memref<128x128xf32, #tpu.memory_space<vmem>>, %arg5: memref<128x128xf32, #tpu.memory_space<vmem>>, %arg6: memref<128x128xf32, #tpu.memory_space<vmem>>, %arg7: memref<16x128xf32, #tpu.memory_space<vmem>>, %arg8: memref<16x128xf32, #tpu.memory_space<vmem>>) attributes {dimension_semantics = [#tpu.dimension_semantics<parallel>], iteration_bounds = array<i64: 1>, scalar_prefetch = 0 : i64, scratch_operands = 0 : i64, tpu.core_type = #tpu.core_type<tc>, window_params = [{transform_indices = @transform_0, window_bounds = array<i64: 16, 128>}, {transform_indices = @transform_1, window_bounds = array<i64: 16, 8>}, {pipeline_mode = #tpu.pipeline_mode<synchronous>, transform_indices = @transform_2, window_bounds = array<i64: 128, 384>}, {pipeline_mode = #tpu.pipeline_mode<synchronous>, transform_indices = @transform_3, window_bounds = array<i64: 128, 128>}, {pipeline_mode = #tpu.pipeline_mode<synchronous>, transform_indices = @transform_4, window_bounds = array<i64: 128, 128>}, {pipeline_mode = #tpu.pipeline_mode<synchronous>, transform_indices = @transform_5, window_bounds = array<i64: 128, 128>}, {pipeline_mode = #tpu.pipeline_mode<synchronous>, transform_indices = @transform_6, window_bounds = array<i64: 16, 128>}, {transform_indices = @transform_7, window_bounds = array<i64: 16, 128>}]} {
    %c0 = arith.constant 0 : index
    %c0_0 = arith.constant 0 : index
    %0 = vector.load %arg1[%c0, %c0_0] : memref<16x128xf32, #tpu.memory_space<vmem>>, vector<16x128xf32>
    %c0_1 = arith.constant 0 : index
    %c0_2 = arith.constant 0 : index
    %1 = vector.load %arg2[%c0_1, %c0_2] : memref<16x8xf32, #tpu.memory_space<vmem>>, vector<16x8xf32>
    %2 = vector.shape_cast %1 : vector<16x8xf32> to vector<2x8x8xf32>
    %c0_3 = arith.constant 0 : index
    %c0_4 = arith.constant 0 : index
    %3 = vector.load %arg3[%c0_3, %c0_4] : memref<128x384xf32, #tpu.memory_space<vmem>>, vector<128x384xf32>
    %cst = arith.constant dense<0.000000e+00> : vector<16x384xf32>
    %4 = tpu.matmul %0, %3, %cst {dimension_numbers = #tpu.dot_dimension_numbers<[1], [0], [0], [1], [0, 0, 1, 1], [], []>} : vector<16x128xf32>, vector<128x384xf32>, vector<16x384xf32> -> vector<16x384xf32>
    %5 = vector.extract_strided_slice %4 {offsets = [0, 0], sizes = [16, 128], strides = [1, 1]} : vector<16x384xf32> to vector<16x128xf32>
    %c0_5 = arith.constant 0 : index
    %c0_6 = arith.constant 0 : index
    %6 = vector.load %arg7[%c0_5, %c0_6] : memref<16x128xf32, #tpu.memory_space<vmem>>, vector<1x128xf32>
    %7 = vector.broadcast %6 : vector<1x128xf32> to vector<16x128xf32>
    %8 = arith.addf %5, %7 : vector<16x128xf32>
    %9 = vector.shape_cast %8 : vector<16x128xf32> to vector<2x8x128xf32>
    %10 = vector.extract_strided_slice %4 {offsets = [0, 128], sizes = [16, 128], strides = [1, 1]} : vector<16x384xf32> to vector<16x128xf32>
    %c1 = arith.constant 1 : index
    %c0_7 = arith.constant 0 : index
    %11 = vector.load %arg7[%c1, %c0_7] : memref<16x128xf32, #tpu.memory_space<vmem>>, vector<1x128xf32>
    %12 = vector.broadcast %11 : vector<1x128xf32> to vector<16x128xf32>
    %13 = arith.addf %10, %12 : vector<16x128xf32>
    %14 = vector.shape_cast %13 : vector<16x128xf32> to vector<2x8x128xf32>
    %15 = vector.extract_strided_slice %4 {offsets = [0, 256], sizes = [16, 128], strides = [1, 1]} : vector<16x384xf32> to vector<16x128xf32>
    %c2 = arith.constant 2 : index
    %c0_8 = arith.constant 0 : index
    %16 = vector.load %arg7[%c2, %c0_8] : memref<16x128xf32, #tpu.memory_space<vmem>>, vector<1x128xf32>
    %17 = vector.broadcast %16 : vector<1x128xf32> to vector<16x128xf32>
    %18 = arith.addf %15, %17 : vector<16x128xf32>
    %19 = vector.shape_cast %18 : vector<16x128xf32> to vector<2x8x128xf32>
    %cst_9 = arith.constant 0.000000e+00 : f32
    %20 = vector.broadcast %cst_9 : f32 to vector<2x8x128xf32>
    %c10 = arith.constant 10 : index
    %c0_10 = arith.constant 0 : index
    %21 = vector.load %arg7[%c10, %c0_10] : memref<16x128xf32, #tpu.memory_space<vmem>>, vector<1x128xf32>
    %22 = vector.shape_cast %21 : vector<1x128xf32> to vector<1x1x128xf32>
    %23 = vector.broadcast %22 : vector<1x1x128xf32> to vector<2x8x128xf32>
    %24 = arith.mulf %14, %23 : vector<2x8x128xf32>
    "tpu.trace_start"() <{level = 10 : i32, message = "bqd,bkd->bqk"}> : () -> ()
    %cst_11 = arith.constant dense<0.000000e+00> : vector<2x8x8xf32>
    %25 = tpu.matmul %9, %24, %cst_11 {dimension_numbers = #tpu.dot_dimension_numbers<[2], [2], [1], [1], [0, 0, 0, 1, 1, 1], [0], [0]>} : vector<2x8x128xf32>, vector<2x8x128xf32>, vector<2x8x8xf32> -> vector<2x8x8xf32>
    "tpu.trace_stop"() : () -> ()
    %26 = arith.addf %25, %2 : vector<2x8x8xf32>
    %cst_12 = arith.constant dense<0xFF800000> : vector<2x8xf32>
    %27 = vector.multi_reduction <maximumf>, %26, %cst_12 [2] : vector<2x8x8xf32> to vector<2x8xf32>
    %28 = vector.shape_cast %27 : vector<2x8xf32> to vector<2x8x1xf32>
    %29 = vector.broadcast %28 : vector<2x8x1xf32> to vector<2x8x8xf32>
    %30 = arith.subf %26, %29 : vector<2x8x8xf32>
    %31 = math.exp %30 : vector<2x8x8xf32>
    %cst_13 = arith.constant dense<0.000000e+00> : vector<2x8xf32>
    %32 = vector.multi_reduction <add>, %31, %cst_13 [2] : vector<2x8x8xf32> to vector<2x8xf32>
    %33 = vector.shape_cast %32 : vector<2x8xf32> to vector<2x8x1xf32>
    %34 = tpu.reciprocal %33 : vector<2x8x1xf32> -> vector<2x8x1xf32>
    %35 = vector.broadcast %22 : vector<1x1x128xf32> to vector<2x8x128xf32>
    %36 = arith.mulf %19, %35 : vector<2x8x128xf32>
    "tpu.trace_start"() <{level = 10 : i32, message = "bqk,bkd->bqd"}> : () -> ()
    %cst_14 = arith.constant dense<0.000000e+00> : vector<2x8x128xf32>
    %37 = tpu.matmul %31, %36, %cst_14 {dimension_numbers = #tpu.dot_dimension_numbers<[2], [1], [1], [2], [0, 0, 0, 1, 1, 2], [0], [0]>} : vector<2x8x8xf32>, vector<2x8x128xf32>, vector<2x8x128xf32> -> vector<2x8x128xf32>
    "tpu.trace_stop"() : () -> ()
    %38 = vector.broadcast %34 : vector<2x8x1xf32> to vector<2x8x128xf32>
    %39 = arith.mulf %37, %38 : vector<2x8x128xf32>
    %40 = arith.addf %20, %39 : vector<2x8x128xf32>
    %c11 = arith.constant 11 : index
    %c0_15 = arith.constant 0 : index
    %41 = vector.load %arg7[%c11, %c0_15] : memref<16x128xf32, #tpu.memory_space<vmem>>, vector<1x128xf32>
    %42 = vector.shape_cast %41 : vector<1x128xf32> to vector<1x1x128xf32>
    %43 = vector.broadcast %42 : vector<1x1x128xf32> to vector<2x8x128xf32>
    %44 = arith.mulf %14, %43 : vector<2x8x128xf32>
    "tpu.trace_start"() <{level = 10 : i32, message = "bqd,bkd->bqk"}> : () -> ()
    %cst_16 = arith.constant dense<0.000000e+00> : vector<2x8x8xf32>
    %45 = tpu.matmul %9, %44, %cst_16 {dimension_numbers = #tpu.dot_dimension_numbers<[2], [2], [1], [1], [0, 0, 0, 1, 1, 1], [0], [0]>} : vector<2x8x128xf32>, vector<2x8x128xf32>, vector<2x8x8xf32> -> vector<2x8x8xf32>
    "tpu.trace_stop"() : () -> ()
    %46 = arith.addf %45, %2 : vector<2x8x8xf32>
    %cst_17 = arith.constant dense<0xFF800000> : vector<2x8xf32>
    %47 = vector.multi_reduction <maximumf>, %46, %cst_17 [2] : vector<2x8x8xf32> to vector<2x8xf32>
    %48 = vector.shape_cast %47 : vector<2x8xf32> to vector<2x8x1xf32>
    %49 = vector.broadcast %48 : vector<2x8x1xf32> to vector<2x8x8xf32>
    %50 = arith.subf %46, %49 : vector<2x8x8xf32>
    %51 = math.exp %50 : vector<2x8x8xf32>
    %cst_18 = arith.constant dense<0.000000e+00> : vector<2x8xf32>
    %52 = vector.multi_reduction <add>, %51, %cst_18 [2] : vector<2x8x8xf32> to vector<2x8xf32>
    %53 = vector.shape_cast %52 : vector<2x8xf32> to vector<2x8x1xf32>
    %54 = tpu.reciprocal %53 : vector<2x8x1xf32> -> vector<2x8x1xf32>
    %55 = vector.broadcast %42 : vector<1x1x128xf32> to vector<2x8x128xf32>
    %56 = arith.mulf %19, %55 : vector<2x8x128xf32>
    "tpu.trace_start"() <{level = 10 : i32, message = "bqk,bkd->bqd"}> : () -> ()
    %cst_19 = arith.constant dense<0.000000e+00> : vector<2x8x128xf32>
    %57 = tpu.matmul %51, %56, %cst_19 {dimension_numbers = #tpu.dot_dimension_numbers<[2], [1], [1], [2], [0, 0, 0, 1, 1, 2], [0], [0]>} : vector<2x8x8xf32>, vector<2x8x128xf32>, vector<2x8x128xf32> -> vector<2x8x128xf32>
    "tpu.trace_stop"() : () -> ()
    %58 = vector.broadcast %54 : vector<2x8x1xf32> to vector<2x8x128xf32>
    %59 = arith.mulf %57, %58 : vector<2x8x128xf32>
    %60 = arith.addf %40, %59 : vector<2x8x128xf32>
    %c12 = arith.constant 12 : index
    %c0_20 = arith.constant 0 : index
    %61 = vector.load %arg7[%c12, %c0_20] : memref<16x128xf32, #tpu.memory_space<vmem>>, vector<1x128xf32>
    %62 = vector.shape_cast %61 : vector<1x128xf32> to vector<1x1x128xf32>
    %63 = vector.broadcast %62 : vector<1x1x128xf32> to vector<2x8x128xf32>
    %64 = arith.mulf %14, %63 : vector<2x8x128xf32>
    "tpu.trace_start"() <{level = 10 : i32, message = "bqd,bkd->bqk"}> : () -> ()
    %cst_21 = arith.constant dense<0.000000e+00> : vector<2x8x8xf32>
    %65 = tpu.matmul %9, %64, %cst_21 {dimension_numbers = #tpu.dot_dimension_numbers<[2], [2], [1], [1], [0, 0, 0, 1, 1, 1], [0], [0]>} : vector<2x8x128xf32>, vector<2x8x128xf32>, vector<2x8x8xf32> -> vector<2x8x8xf32>
    "tpu.trace_stop"() : () -> ()
    %66 = arith.addf %65, %2 : vector<2x8x8xf32>
    %cst_22 = arith.constant dense<0xFF800000> : vector<2x8xf32>
    %67 = vector.multi_reduction <maximumf>, %66, %cst_22 [2] : vector<2x8x8xf32> to vector<2x8xf32>
    %68 = vector.shape_cast %67 : vector<2x8xf32> to vector<2x8x1xf32>
    %69 = vector.broadcast %68 : vector<2x8x1xf32> to vector<2x8x8xf32>
    %70 = arith.subf %66, %69 : vector<2x8x8xf32>
    %71 = math.exp %70 : vector<2x8x8xf32>
    %cst_23 = arith.constant dense<0.000000e+00> : vector<2x8xf32>
    %72 = vector.multi_reduction <add>, %71, %cst_23 [2] : vector<2x8x8xf32> to vector<2x8xf32>
    %73 = vector.shape_cast %72 : vector<2x8xf32> to vector<2x8x1xf32>
    %74 = tpu.reciprocal %73 : vector<2x8x1xf32> -> vector<2x8x1xf32>
    %75 = vector.broadcast %62 : vector<1x1x128xf32> to vector<2x8x128xf32>
    %76 = arith.mulf %19, %75 : vector<2x8x128xf32>
    "tpu.trace_start"() <{level = 10 : i32, message = "bqk,bkd->bqd"}> : () -> ()
    %cst_24 = arith.constant dense<0.000000e+00> : vector<2x8x128xf32>
    %77 = tpu.matmul %71, %76, %cst_24 {dimension_numbers = #tpu.dot_dimension_numbers<[2], [1], [1], [2], [0, 0, 0, 1, 1, 2], [0], [0]>} : vector<2x8x8xf32>, vector<2x8x128xf32>, vector<2x8x128xf32> -> vector<2x8x128xf32>
    "tpu.trace_stop"() : () -> ()
    %78 = vector.broadcast %74 : vector<2x8x1xf32> to vector<2x8x128xf32>
    %79 = arith.mulf %77, %78 : vector<2x8x128xf32>
    %80 = arith.addf %60, %79 : vector<2x8x128xf32>
    %c13 = arith.constant 13 : index
    %c0_25 = arith.constant 0 : index
    %81 = vector.load %arg7[%c13, %c0_25] : memref<16x128xf32, #tpu.memory_space<vmem>>, vector<1x128xf32>
    %82 = vector.shape_cast %81 : vector<1x128xf32> to vector<1x1x128xf32>
    %83 = vector.broadcast %82 : vector<1x1x128xf32> to vector<2x8x128xf32>
    %84 = arith.mulf %14, %83 : vector<2x8x128xf32>
    "tpu.trace_start"() <{level = 10 : i32, message = "bqd,bkd->bqk"}> : () -> ()
    %cst_26 = arith.constant dense<0.000000e+00> : vector<2x8x8xf32>
    %85 = tpu.matmul %9, %84, %cst_26 {dimension_numbers = #tpu.dot_dimension_numbers<[2], [2], [1], [1], [0, 0, 0, 1, 1, 1], [0], [0]>} : vector<2x8x128xf32>, vector<2x8x128xf32>, vector<2x8x8xf32> -> vector<2x8x8xf32>
    "tpu.trace_stop"() : () -> ()
    %86 = arith.addf %85, %2 : vector<2x8x8xf32>
    %cst_27 = arith.constant dense<0xFF800000> : vector<2x8xf32>
    %87 = vector.multi_reduction <maximumf>, %86, %cst_27 [2] : vector<2x8x8xf32> to vector<2x8xf32>
    %88 = vector.shape_cast %87 : vector<2x8xf32> to vector<2x8x1xf32>
    %89 = vector.broadcast %88 : vector<2x8x1xf32> to vector<2x8x8xf32>
    %90 = arith.subf %86, %89 : vector<2x8x8xf32>
    %91 = math.exp %90 : vector<2x8x8xf32>
    %cst_28 = arith.constant dense<0.000000e+00> : vector<2x8xf32>
    %92 = vector.multi_reduction <add>, %91, %cst_28 [2] : vector<2x8x8xf32> to vector<2x8xf32>
    %93 = vector.shape_cast %92 : vector<2x8xf32> to vector<2x8x1xf32>
    %94 = tpu.reciprocal %93 : vector<2x8x1xf32> -> vector<2x8x1xf32>
    %95 = vector.broadcast %82 : vector<1x1x128xf32> to vector<2x8x128xf32>
    %96 = arith.mulf %19, %95 : vector<2x8x128xf32>
    "tpu.trace_start"() <{level = 10 : i32, message = "bqk,bkd->bqd"}> : () -> ()
    %cst_29 = arith.constant dense<0.000000e+00> : vector<2x8x128xf32>
    %97 = tpu.matmul %91, %96, %cst_29 {dimension_numbers = #tpu.dot_dimension_numbers<[2], [1], [1], [2], [0, 0, 0, 1, 1, 2], [0], [0]>} : vector<2x8x8xf32>, vector<2x8x128xf32>, vector<2x8x128xf32> -> vector<2x8x128xf32>
    "tpu.trace_stop"() : () -> ()
    %98 = vector.broadcast %94 : vector<2x8x1xf32> to vector<2x8x128xf32>
    %99 = arith.mulf %97, %98 : vector<2x8x128xf32>
    %100 = arith.addf %80, %99 : vector<2x8x128xf32>
    %101 = vector.shape_cast %100 : vector<2x8x128xf32> to vector<16x128xf32>
    %c0_30 = arith.constant 0 : index
    %c0_31 = arith.constant 0 : index
    %102 = vector.load %arg4[%c0_30, %c0_31] : memref<128x128xf32, #tpu.memory_space<vmem>>, vector<128x128xf32>
    %cst_32 = arith.constant dense<0.000000e+00> : vector<16x128xf32>
    %103 = tpu.matmul %101, %102, %cst_32 {dimension_numbers = #tpu.dot_dimension_numbers<[1], [0], [0], [1], [0, 0, 1, 1], [], []>} : vector<16x128xf32>, vector<128x128xf32>, vector<16x128xf32> -> vector<16x128xf32>
    %c3 = arith.constant 3 : index
    %c0_33 = arith.constant 0 : index
    %104 = vector.load %arg7[%c3, %c0_33] : memref<16x128xf32, #tpu.memory_space<vmem>>, vector<1x128xf32>
    %105 = vector.broadcast %104 : vector<1x128xf32> to vector<16x128xf32>
    %106 = arith.addf %103, %105 : vector<16x128xf32>
    %107 = arith.addf %106, %0 : vector<16x128xf32>
    %c4 = arith.constant 4 : index
    %c0_34 = arith.constant 0 : index
    %108 = vector.load %arg7[%c4, %c0_34] : memref<16x128xf32, #tpu.memory_space<vmem>>, vector<1x128xf32>
    %c5 = arith.constant 5 : index
    %c0_35 = arith.constant 0 : index
    %109 = vector.load %arg7[%c5, %c0_35] : memref<16x128xf32, #tpu.memory_space<vmem>>, vector<1x128xf32>
    %cst_36 = arith.constant dense<0.000000e+00> : vector<16xf32>
    %110 = vector.multi_reduction <add>, %107, %cst_36 [1] : vector<16x128xf32> to vector<16xf32>
    %111 = vector.shape_cast %110 : vector<16xf32> to vector<16x1xf32>
    %112 = arith.mulf %107, %107 : vector<16x128xf32>
    %cst_37 = arith.constant dense<0.000000e+00> : vector<16xf32>
    %113 = vector.multi_reduction <add>, %112, %cst_37 [1] : vector<16x128xf32> to vector<16xf32>
    %114 = vector.shape_cast %113 : vector<16xf32> to vector<16x1xf32>
    %cst_38 = arith.constant 3.125000e-02 : f32
    %115 = vector.broadcast %cst_38 : f32 to vector<16x1xf32>
    %116 = arith.mulf %111, %115 : vector<16x1xf32>
    %cst_39 = arith.constant 3.125000e-02 : f32
    %117 = vector.broadcast %cst_39 : f32 to vector<16x1xf32>
    %118 = arith.mulf %114, %117 : vector<16x1xf32>
    %119 = arith.mulf %116, %116 : vector<16x1xf32>
    %120 = arith.subf %118, %119 : vector<16x1xf32>
    %cst_40 = arith.constant 0.000000e+00 : f32
    %121 = vector.broadcast %cst_40 : f32 to vector<16x1xf32>
    %122 = arith.maximumf %120, %121 : vector<16x1xf32>
    %cst_41 = arith.constant 9.99999996E-13 : f32
    %123 = vector.broadcast %cst_41 : f32 to vector<16x1xf32>
    %124 = arith.addf %122, %123 : vector<16x1xf32>
    %125 = math.rsqrt %124 : vector<16x1xf32>
    %126 = vector.broadcast %116 : vector<16x1xf32> to vector<16x128xf32>
    %127 = arith.subf %107, %126 : vector<16x128xf32>
    %128 = vector.broadcast %125 : vector<16x1xf32> to vector<16x128xf32>
    %129 = arith.mulf %127, %128 : vector<16x128xf32>
    %130 = vector.broadcast %108 : vector<1x128xf32> to vector<16x128xf32>
    %131 = arith.mulf %129, %130 : vector<16x128xf32>
    %132 = vector.broadcast %109 : vector<1x128xf32> to vector<16x128xf32>
    %133 = arith.addf %131, %132 : vector<16x128xf32>
    %c0_42 = arith.constant 0 : index
    %c0_43 = arith.constant 0 : index
    %134 = vector.load %arg5[%c0_42, %c0_43] : memref<128x128xf32, #tpu.memory_space<vmem>>, vector<128x128xf32>
    %cst_44 = arith.constant dense<0.000000e+00> : vector<16x128xf32>
    %135 = tpu.matmul %133, %134, %cst_44 {dimension_numbers = #tpu.dot_dimension_numbers<[1], [0], [0], [1], [0, 0, 1, 1], [], []>} : vector<16x128xf32>, vector<128x128xf32>, vector<16x128xf32> -> vector<16x128xf32>
    %c6 = arith.constant 6 : index
    %c0_45 = arith.constant 0 : index
    %136 = vector.load %arg7[%c6, %c0_45] : memref<16x128xf32, #tpu.memory_space<vmem>>, vector<1x128xf32>
    %137 = vector.broadcast %136 : vector<1x128xf32> to vector<16x128xf32>
    %138 = arith.addf %135, %137 : vector<16x128xf32>
    %cst_46 = arith.constant 0.000000e+00 : f32
    %139 = vector.broadcast %cst_46 : f32 to vector<16x128xf32>
    %140 = arith.maximumf %138, %139 : vector<16x128xf32>
    %c0_47 = arith.constant 0 : index
    %c0_48 = arith.constant 0 : index
    %141 = vector.load %arg6[%c0_47, %c0_48] : memref<128x128xf32, #tpu.memory_space<vmem>>, vector<128x128xf32>
    %cst_49 = arith.constant dense<0.000000e+00> : vector<16x128xf32>
    %142 = tpu.matmul %140, %141, %cst_49 {dimension_numbers = #tpu.dot_dimension_numbers<[1], [0], [0], [1], [0, 0, 1, 1], [], []>} : vector<16x128xf32>, vector<128x128xf32>, vector<16x128xf32> -> vector<16x128xf32>
    %c7 = arith.constant 7 : index
    %c0_50 = arith.constant 0 : index
    %143 = vector.load %arg7[%c7, %c0_50] : memref<16x128xf32, #tpu.memory_space<vmem>>, vector<1x128xf32>
    %144 = vector.broadcast %143 : vector<1x128xf32> to vector<16x128xf32>
    %145 = arith.addf %142, %144 : vector<16x128xf32>
    %146 = arith.addf %145, %133 : vector<16x128xf32>
    %c8 = arith.constant 8 : index
    %c0_51 = arith.constant 0 : index
    %147 = vector.load %arg7[%c8, %c0_51] : memref<16x128xf32, #tpu.memory_space<vmem>>, vector<1x128xf32>
    %c9 = arith.constant 9 : index
    %c0_52 = arith.constant 0 : index
    %148 = vector.load %arg7[%c9, %c0_52] : memref<16x128xf32, #tpu.memory_space<vmem>>, vector<1x128xf32>
    %cst_53 = arith.constant dense<0.000000e+00> : vector<16xf32>
    %149 = vector.multi_reduction <add>, %146, %cst_53 [1] : vector<16x128xf32> to vector<16xf32>
    %150 = vector.shape_cast %149 : vector<16xf32> to vector<16x1xf32>
    %151 = arith.mulf %146, %146 : vector<16x128xf32>
    %cst_54 = arith.constant dense<0.000000e+00> : vector<16xf32>
    %152 = vector.multi_reduction <add>, %151, %cst_54 [1] : vector<16x128xf32> to vector<16xf32>
    %153 = vector.shape_cast %152 : vector<16xf32> to vector<16x1xf32>
    %cst_55 = arith.constant 3.125000e-02 : f32
    %154 = vector.broadcast %cst_55 : f32 to vector<16x1xf32>
    %155 = arith.mulf %150, %154 : vector<16x1xf32>
    %cst_56 = arith.constant 3.125000e-02 : f32
    %156 = vector.broadcast %cst_56 : f32 to vector<16x1xf32>
    %157 = arith.mulf %153, %156 : vector<16x1xf32>
    %158 = arith.mulf %155, %155 : vector<16x1xf32>
    %159 = arith.subf %157, %158 : vector<16x1xf32>
    %cst_57 = arith.constant 0.000000e+00 : f32
    %160 = vector.broadcast %cst_57 : f32 to vector<16x1xf32>
    %161 = arith.maximumf %159, %160 : vector<16x1xf32>
    %cst_58 = arith.constant 9.99999996E-13 : f32
    %162 = vector.broadcast %cst_58 : f32 to vector<16x1xf32>
    %163 = arith.addf %161, %162 : vector<16x1xf32>
    %164 = math.rsqrt %163 : vector<16x1xf32>
    %165 = vector.broadcast %155 : vector<16x1xf32> to vector<16x128xf32>
    %166 = arith.subf %146, %165 : vector<16x128xf32>
    %167 = vector.broadcast %164 : vector<16x1xf32> to vector<16x128xf32>
    %168 = arith.mulf %166, %167 : vector<16x128xf32>
    %169 = vector.broadcast %147 : vector<1x128xf32> to vector<16x128xf32>
    %170 = arith.mulf %168, %169 : vector<16x128xf32>
    %171 = vector.broadcast %148 : vector<1x128xf32> to vector<16x128xf32>
    %172 = arith.addf %170, %171 : vector<16x128xf32>
    %c0_59 = arith.constant 0 : index
    %c0_60 = arith.constant 0 : index
    %173 = vector.load %arg8[%c0_59, %c0_60] : memref<16x128xf32, #tpu.memory_space<vmem>>, vector<16x128xf32>
    tpu.vector_store %arg8[%c0_59, %c0_60], %172 {strides = array<i32>} : memref<16x128xf32, #tpu.memory_space<vmem>>, vector<16x128xf32>,
    return
  }
  func.func @transform_0(%arg0: i32) -> (i32, i32) {
    %c0_i32 = arith.constant 0 : i32
    %c0_i32_0 = arith.constant 0 : i32
    return %arg0, %c0_i32 : i32, i32
  }
  func.func @transform_1(%arg0: i32) -> (i32, i32) {
    %c0_i32 = arith.constant 0 : i32
    %c0_i32_0 = arith.constant 0 : i32
    return %arg0, %c0_i32 : i32, i32
  }
  func.func @transform_2(%arg0: i32) -> (i32, i32) {
    %c0_i32 = arith.constant 0 : i32
    %c0_i32_0 = arith.constant 0 : i32
    %c0_i32_1 = arith.constant 0 : i32
    return %c0_i32, %c0_i32_0 : i32, i32
  }
  func.func @transform_3(%arg0: i32) -> (i32, i32) {
    %c0_i32 = arith.constant 0 : i32
    %c0_i32_0 = arith.constant 0 : i32
    %c0_i32_1 = arith.constant 0 : i32
    return %c0_i32, %c0_i32_0 : i32, i32
  }
  func.func @transform_4(%arg0: i32) -> (i32, i32) {
    %c0_i32 = arith.constant 0 : i32
    %c0_i32_0 = arith.constant 0 : i32
    %c0_i32_1 = arith.constant 0 : i32
    return %c0_i32, %c0_i32_0 : i32, i32
  }
  func.func @transform_5(%arg0: i32) -> (i32, i32) {
    %c0_i32 = arith.constant 0 : i32
    %c0_i32_0 = arith.constant 0 : i32
    %c0_i32_1 = arith.constant 0 : i32
    return %c0_i32, %c0_i32_0 : i32, i32
  }
  func.func @transform_6(%arg0: i32) -> (i32, i32) {
    %c0_i32 = arith.constant 0 : i32
    %c0_i32_0 = arith.constant 0 : i32
    %c0_i32_1 = arith.constant 0 : i32
    return %c0_i32, %c0_i32_0 : i32, i32
  }
  func.func @transform_7(%arg0: i32) -> (i32, i32) {
    %c0_i32 = arith.constant 0 : i32
    %c0_i32_0 = arith.constant 0 : i32
    return %arg0, %c0_i32 : i32, i32
  }
}

</mosaic_0001>

<llo_original>
// kernel: tpu_custom_call.1
$region0: #{tpu_custom_call.1}
  #allocation0 [shape = 'u32[]', space=smem, size = 0x4, offset = 0x4, fixed_abs, tag = 'smem constant byte address 0x4 - core index']
  #allocation1 [shape = 'u32[144,128]{1,0:T(1,128)}', space=vmem, size = 0x12000, scoped, tag = 'internal scratch']
  %s0 = inlined_call_operand.vmem [shape: f32[16,128], index: 0, kind: input, shape index: {}]
  %s1 = inlined_call_operand.vmem [shape: f32[16,8], index: 1, kind: input, shape index: {}]
  %s2 = inlined_call_operand.hbm [shape: f32[128,384], index: 2, kind: input, shape index: {}]
  %s3 = inlined_call_operand.hbm [shape: f32[128,128], index: 3, kind: input, shape index: {}]
  %s4 = inlined_call_operand.hbm [shape: f32[128,128], index: 4, kind: input, shape index: {}]
  %s5 = inlined_call_operand.hbm [shape: f32[128,128], index: 5, kind: input, shape index: {}]
  %s6 = inlined_call_operand.vmem [shape: f32[16,128], index: 6, kind: input, shape index: {}]
  %s7 = inlined_call_operand.hbm [shape: f32[16,128], index: 7, kind: output, shape index: {}]
  %s8 = sld [smem:[#allocation0]]
  $region54: #{tpu_custom_call.1} parent=0
    _
  %s10 = ssub.s32 1, %s8
  %s11 = scalar_select 0, %s10, %s8
  $region1: #{tpu_custom_call.1} parent=0
    #allocation2 [shape = 'u8[196608]{0}', space=vmem, size = 0x30000, scoped, tag = 'input window, operand 2, single buffered']
    #allocation3 [shape = 's32[1]{0}', space=sflag, size = 0x4, scoped, tag = 'scoped memory for tpu_custom_call.1']
    #allocation4 [shape = 's32[1]{0}', space=sflag, size = 0x4, scoped, tag = 'scoped memory for tpu_custom_call.1']
    #allocation5 [shape = 'u8[65536]{0}', space=vmem, size = 0x10000, scoped, tag = 'input window, operand 3, single buffered']
    #allocation6 [shape = 's32[1]{0}', space=sflag, size = 0x4, scoped, tag = 'scoped memory for tpu_custom_call.1']
    #allocation7 [shape = 'u8[65536]{0}', space=vmem, size = 0x10000, scoped, tag = 'input window, operand 4, single buffered']
    #allocation8 [shape = 'u8[65536]{0}', space=vmem, size = 0x10000, scoped, tag = 'input window, operand 5, single buffered']
    #allocation9 [shape = 's32[1]{0}', space=sflag, size = 0x4, scoped, tag = 'scoped memory for tpu_custom_call.1']
    #allocation10 [shape = 'u8[8192]{0}', space=vmem, size = 0x2000, scoped, tag = 'output window, operand 0, single buffered']
    %12 = vsyncpa [#allocation3], 0
    %13 = vsyncpa [#allocation6], 0
    %14 = vsyncpa [#allocation9], 0
    %15 = vsyncpa [#allocation4], 0
    // Predicated region
    $region2: #{tpu_custom_call.1} parent=1 // pred_check
      _
    $region3: #{tpu_custom_call.1} parent=1 // pred_check_branch
      %17 = sbr.rel (0) target = $region5
    $region4: #{tpu_custom_call.1} parent=1 // pred_region
      _
    $region5: #{tpu_custom_call.1} parent=1 // pred_fallthru
      _
    // Predicated region
    $region6: #{tpu_custom_call.1} parent=1 // pred_check
      _
    $region7: #{tpu_custom_call.1} parent=1 // pred_check_branch
      %19 = sbr.rel (0) target = $region9
    $region8: #{tpu_custom_call.1} parent=1 // pred_region
      _
    $region9: #{tpu_custom_call.1} parent=1 // pred_fallthru
      _
    // Predicated region
    $region10: #{tpu_custom_call.1} parent=1 // pred_check
      _
    $region11: #{tpu_custom_call.1} parent=1 // pred_check_branch
      %21 = sbr.rel (0) target = $region13
    $region12: #{tpu_custom_call.1} parent=1 // pred_region
      %s23 = ssub.s32 6144, 6144
      %24 = vsyncadd [#allocation3], %s23
      %s25 = sshll.u32 [#allocation2], 4
      %s26 = int_to_ptr.vmem [resolvable:$true] %s25
      %31 = dma.hbm_to_vmem [thread:$0]  %s2, 6144, %s26, [#allocation3], 384, 384, 24
    $region13: #{tpu_custom_call.1} parent=1 // pred_fallthru
      _
    // Predicated region
    $region14: #{tpu_custom_call.1} parent=1 // pred_check
      _
    $region15: #{tpu_custom_call.1} parent=1 // pred_check_branch
      %33 = sbr.rel (0) target = $region17
    $region16: #{tpu_custom_call.1} parent=1 // pred_region
      %s35 = ssub.s32 2048, 2048
      %36 = vsyncadd [#allocation6], %s35
      %s37 = sshll.u32 [#allocation5], 4
      %s38 = int_to_ptr.vmem [resolvable:$true] %s37
      %43 = dma.hbm_to_vmem [thread:$0]  %s3, 2048, %s38, [#allocation6], 128, 128, 8
    $region17: #{tpu_custom_call.1} parent=1 // pred_fallthru
      _
    // Predicated region
    $region18: #{tpu_custom_call.1} parent=1 // pred_check
      _
    $region19: #{tpu_custom_call.1} parent=1 // pred_check_branch
      %45 = sbr.rel (0) target = $region21
    $region20: #{tpu_custom_call.1} parent=1 // pred_region
      %s47 = ssub.s32 2048, 2048
      %48 = vsyncadd [#allocation6], %s47
      %s49 = sshll.u32 [#allocation7], 4
      %s50 = int_to_ptr.vmem [resolvable:$true] %s49
      %55 = dma.hbm_to_vmem [thread:$0]  %s4, 2048, %s50, [#allocation6], 128, 128, 8
    $region21: #{tpu_custom_call.1} parent=1 // pred_fallthru
      _
    // Predicated region
    $region22: #{tpu_custom_call.1} parent=1 // pred_check
      _
    $region23: #{tpu_custom_call.1} parent=1 // pred_check_branch
      %57 = sbr.rel (0) target = $region25
    $region24: #{tpu_custom_call.1} parent=1 // pred_region
      %s59 = ssub.s32 2048, 2048
      %60 = vsyncadd [#allocation9], %s59
      %s61 = sshll.u32 [#allocation8], 4
      %s62 = int_to_ptr.vmem [resolvable:$true] %s61
      %67 = dma.hbm_to_vmem [thread:$0]  %s5, 2048, %s62, [#allocation9], 128, 128, 8
    $region25: #{tpu_custom_call.1} parent=1 // pred_fallthru
      _
    // Predicated region
    $region26: #{tpu_custom_call.1} parent=1 // pred_check
      _
    $region27: #{tpu_custom_call.1} parent=1 // pred_check_branch
      %69 = sbr.rel (0) target = $region29
    $region28: #{tpu_custom_call.1} parent=1 // pred_region
      _
    $region29: #{tpu_custom_call.1} parent=1 // pred_fallthru
      _
    // Predicated region
    $region30: #{tpu_custom_call.1} parent=1 // pred_check
      _
    $region31: #{tpu_custom_call.1} parent=1 // pred_check_branch
      %71 = sbr.rel (0) target = $region33
    $region32: #{tpu_custom_call.1} parent=1 // pred_region
      %72 = dma.done [#allocation3], 6144
    $region33: #{tpu_custom_call.1} parent=1 // pred_fallthru
      _
    // Predicated region
    $region34: #{tpu_custom_call.1} parent=1 // pred_check
      _
    $region35: #{tpu_custom_call.1} parent=1 // pred_check_branch
      %74 = sbr.rel (0) target = $region37
    $region36: #{tpu_custom_call.1} parent=1 // pred_region
      %75 = dma.done [#allocation6], 2048
    $region37: #{tpu_custom_call.1} parent=1 // pred_fallthru
      _
    // Predicated region
    $region38: #{tpu_custom_call.1} parent=1 // pred_check
      _
    $region39: #{tpu_custom_call.1} parent=1 // pred_check_branch
      %77 = sbr.rel (0) target = $region41
    $region40: #{tpu_custom_call.1} parent=1 // pred_region
      %78 = dma.done [#allocation6], 2048
    $region41: #{tpu_custom_call.1} parent=1 // pred_fallthru
      _
    // Predicated region
    $region42: #{tpu_custom_call.1} parent=1 // pred_check
      _
    $region43: #{tpu_custom_call.1} parent=1 // pred_check_branch
      %80 = sbr.rel (0) target = $region45
    $region44: #{tpu_custom_call.1} parent=1 // pred_region
      %81 = dma.done [#allocation9], 2048
    $region45: #{tpu_custom_call.1} parent=1 // pred_fallthru
      _
    %v82 = vld [vmem:[%s0] sm:$0xff]
    %v83 = vld [vmem:[%s0 + $0x8] sm:$0xff]
    %v84 = vld [vmem:[%s1] sm:$0xff]
    %v85 = vld [vmem:[%s1 + $0x8] sm:$0xff]
    %v86 = vld [vmem:[#allocation2] sm:$0xff]
    %v87 = vld [vmem:[#allocation2 + $0x8] sm:$0xff]
    %v88 = vld [vmem:[#allocation2 + $0x10] sm:$0xff]
    %v89 = vld [vmem:[#allocation2 + $0x18] sm:$0xff]
    %v90 = vld [vmem:[#allocation2 + $0x20] sm:$0xff]
    %v91 = vld [vmem:[#allocation2 + $0x28] sm:$0xff]
    %v92 = vld [vmem:[#allocation2 + $0x30] sm:$0xff]
    %v93 = vld [vmem:[#allocation2 + $0x38] sm:$0xff]
    %v94 = vld [vmem:[#allocation2 + $0x40] sm:$0xff]
    %v95 = vld [vmem:[#allocation2 + $0x48] sm:$0xff]
    %v96 = vld [vmem:[#allocation2 + $0x50] sm:$0xff]
    %v97 = vld [vmem:[#allocation2 + $0x58] sm:$0xff]
    %v98 = vld [vmem:[#allocation2 + $0x60] sm:$0xff]
    %v99 = vld [vmem:[#allocation2 + $0x68] sm:$0xff]
    %v100 = vld [vmem:[#allocation2 + $0x70] sm:$0xff]
    %v101 = vld [vmem:[#allocation2 + $0x78] sm:$0xff]
    %v102 = vld [vmem:[#allocation2 + $0x80] sm:$0xff]
    %v103 = vld [vmem:[#allocation2 + $0x88] sm:$0xff]
    %v104 = vld [vmem:[#allocation2 + $0x90] sm:$0xff]
    %v105 = vld [vmem:[#allocation2 + $0x98] sm:$0xff]
    %v106 = vld [vmem:[#allocation2 + $0xa0] sm:$0xff]
    %v107 = vld [vmem:[#allocation2 + $0xa8] sm:$0xff]
    %v108 = vld [vmem:[#allocation2 + $0xb0] sm:$0xff]
    %v109 = vld [vmem:[#allocation2 + $0xb8] sm:$0xff]
    %v110 = vld [vmem:[#allocation2 + $0xc0] sm:$0xff]
    %v111 = vld [vmem:[#allocation2 + $0xc8] sm:$0xff]
    %v112 = vld [vmem:[#allocation2 + $0xd0] sm:$0xff]
    %v113 = vld [vmem:[#allocation2 + $0xd8] sm:$0xff]
    %v114 = vld [vmem:[#allocation2 + $0xe0] sm:$0xff]
    %v115 = vld [vmem:[#allocation2 + $0xe8] sm:$0xff]
    %v116 = vld [vmem:[#allocation2 + $0xf0] sm:$0xff]
    %v117 = vld [vmem:[#allocation2 + $0xf8] sm:$0xff]
    %v118 = vld [vmem:[#allocation2 + $0x100] sm:$0xff]
    %v119 = vld [vmem:[#allocation2 + $0x108] sm:$0xff]
    %v120 = vld [vmem:[#allocation2 + $0x110] sm:$0xff]
    %v121 = vld [vmem:[#allocation2 + $0x118] sm:$0xff]
    %v122 = vld [vmem:[#allocation2 + $0x120] sm:$0xff]
    %v123 = vld [vmem:[#allocation2 + $0x128] sm:$0xff]
    %v124 = vld [vmem:[#allocation2 + $0x130] sm:$0xff]
    %v125 = vld [vmem:[#allocation2 + $0x138] sm:$0xff]
    %v126 = vld [vmem:[#allocation2 + $0x140] sm:$0xff]
    %v127 = vld [vmem:[#allocation2 + $0x148] sm:$0xff]
    %v128 = vld [vmem:[#allocation2 + $0x150] sm:$0xff]
    %v129 = vld [vmem:[#allocation2 + $0x158] sm:$0xff]
    %v130 = vld [vmem:[#allocation2 + $0x160] sm:$0xff]
    %v131 = vld [vmem:[#allocation2 + $0x168] sm:$0xff]
    %v132 = vld [vmem:[#allocation2 + $0x170] sm:$0xff]
    %v133 = vld [vmem:[#allocation2 + $0x178] sm:$0xff]
    %134 = vmatprep.subr.mxu0 %v87
    %135 = vmatpush1.msra.mxu0 %v86
    %136 = vmatprep.subr.mxu0 %v90
    %137 = vmatpush1.msra.mxu0 %v89
    %138 = vmatprep.subr.mxu0 %v93
    %139 = vmatpush1.msra.mxu0 %v92
    %140 = vmatprep.subr.mxu0 %v96
    %141 = vmatpush1.msra.mxu0 %v95
    %142 = vmatprep.subr.mxu0 %v99
    %143 = vmatpush1.msra.mxu0 %v98
    %144 = vmatprep.subr.mxu0 %v102
    %145 = vmatpush1.msra.mxu0 %v101
    %146 = vmatprep.subr.mxu0 %v105
    %147 = vmatpush1.msra.mxu0 %v104
    %148 = vmatprep.subr.mxu0 %v108
    %149 = vmatpush1.msra.mxu0 %v107
    %150 = vmatprep.subr.mxu0 %v111
    %151 = vmatpush1.msra.mxu0 %v110
    %152 = vmatprep.subr.mxu0 %v114
    %153 = vmatpush1.msra.mxu0 %v113
    %154 = vmatprep.subr.mxu0 %v117
    %155 = vmatpush1.msra.mxu0 %v116
    %156 = vmatprep.subr.mxu0 %v120
    %157 = vmatpush1.msra.mxu0 %v119
    %158 = vmatprep.subr.mxu0 %v123
    %159 = vmatpush1.msra.mxu0 %v122
    %160 = vmatprep.subr.mxu0 %v126
    %161 = vmatpush1.msra.mxu0 %v125
    %162 = vmatprep.subr.mxu0 %v129
    %163 = vmatpush1.msra.mxu0 %v128
    %164 = vmatprep.subr.mxu0 %v132
    %165 = vmatpush1.msra.mxu0 %v131
    %166 = vmatprep.subr.mxu0 0.0
    %167 = vmatpush1.msra.mxu0 0.0
    %168 = vmatprep.subr.mxu0 0.0
    %169 = vmatpush1.msra.mxu0 0.0
    %170 = vmatprep.subr.mxu0 0.0
    %171 = vmatpush1.msra.mxu0 0.0
    %172 = vmatprep.subr.mxu0 0.0
    %173 = vmatpush1.msra.mxu0 0.0
    %174 = vmatprep.subr.mxu0 0.0
    %175 = vmatpush1.msra.mxu0 0.0
    %176 = vmatprep.subr.mxu0 0.0
    %177 = vmatpush1.msra.mxu0 0.0
    %178 = vmatprep.subr.mxu0 0.0
    %179 = vmatpush1.msra.mxu0 0.0
    %180 = vmatprep.subr.mxu0 0.0
    %181 = vmatpush1.msra.mxu0 0.0
    %182 = vmatprep.subr.mxu0 0.0
    %183 = vmatpush1.msra.mxu0 0.0
    %184 = vmatprep.subr.mxu0 0.0
    %185 = vmatpush1.msra.mxu0 0.0
    %186 = vmatprep.subr.mxu0 0.0
    %187 = vmatpush1.msra.mxu0 0.0
    %188 = vmatprep.subr.mxu0 0.0
    %189 = vmatpush1.msra.mxu0 0.0
    %190 = vmatprep.subr.mxu0 0.0
    %191 = vmatpush1.msra.mxu0 0.0
    %192 = vmatprep.subr.mxu0 0.0
    %193 = vmatpush1.msra.mxu0 0.0
    %194 = vmatprep.subr.mxu0 0.0
    %195 = vmatpush1.msra.mxu0 0.0
    %196 = vmatprep.subr.mxu0 0.0
    %197 = vmatpush1.msra.mxu0 0.0
    %198 = vmatprep.mubr.f32.mxu0 0.0
    %199 = vmatmul.mubr.f32.gmra.mrb[0].mxu0 %v82
    %v200 = vpop.f32.mrb[0].mxu0
    %v201 = vadd.f32 0.0, %v200
    %v202 = vpop.f32.mrb[0].mxu0
    %v203 = vadd.f32 0.0, %v202
    %204 = vmatprep.mubr.f32.mxu0 0.0
    %205 = vmatmul.mubr.f32.gmra.mrb[0].mxu0 %v83
    %v206 = vpop.f32.mrb[0].mxu0
    %v207 = vadd.f32 0.0, %v206
    %v208 = vpop.f32.mrb[0].mxu0
    %v209 = vadd.f32 0.0, %v208
    %210 = vdwg.mxu0
    %211 = vmatprep.subr.mxu0 0.0
    %212 = vmatpush1.msra.mxu0 %v88
    %213 = vmatprep.subr.mxu0 0.0
    %214 = vmatpush1.msra.mxu0 %v91
    %215 = vmatprep.subr.mxu0 0.0
    %216 = vmatpush1.msra.mxu0 %v94
    %217 = vmatprep.subr.mxu0 0.0
    %218 = vmatpush1.msra.mxu0 %v97
    %219 = vmatprep.subr.mxu0 0.0
    %220 = vmatpush1.msra.mxu0 %v100
    %221 = vmatprep.subr.mxu0 0.0
    %222 = vmatpush1.msra.mxu0 %v103
    %223 = vmatprep.subr.mxu0 0.0
    %224 = vmatpush1.msra.mxu0 %v106
    %225 = vmatprep.subr.mxu0 0.0
    %226 = vmatpush1.msra.mxu0 %v109
    %227 = vmatprep.subr.mxu0 0.0
    %228 = vmatpush1.msra.mxu0 %v112
    %229 = vmatprep.subr.mxu0 0.0
    %230 = vmatpush1.msra.mxu0 %v115
    %231 = vmatprep.subr.mxu0 0.0
    %232 = vmatpush1.msra.mxu0 %v118
    %233 = vmatprep.subr.mxu0 0.0
    %234 = vmatpush1.msra.mxu0 %v121
    %235 = vmatprep.subr.mxu0 0.0
    %236 = vmatpush1.msra.mxu0 %v124
    %237 = vmatprep.subr.mxu0 0.0
    %238 = vmatpush1.msra.mxu0 %v127
    %239 = vmatprep.subr.mxu0 0.0
    %240 = vmatpush1.msra.mxu0 %v130
    %241 = vmatprep.subr.mxu0 0.0
    %242 = vmatpush1.msra.mxu0 %v133
    %243 = vmatprep.subr.mxu0 0.0
    %244 = vmatpush1.msra.mxu0 0.0
    %245 = vmatprep.subr.mxu0 0.0
    %246 = vmatpush1.msra.mxu0 0.0
    %247 = vmatprep.subr.mxu0 0.0
    %248 = vmatpush1.msra.mxu0 0.0
    %249 = vmatprep.subr.mxu0 0.0
    %250 = vmatpush1.msra.mxu0 0.0
    %251 = vmatprep.subr.mxu0 0.0
    %252 = vmatpush1.msra.mxu0 0.0
    %253 = vmatprep.subr.mxu0 0.0
    %254 = vmatpush1.msra.mxu0 0.0
    %255 = vmatprep.subr.mxu0 0.0
    %256 = vmatpush1.msra.mxu0 0.0
    %257 = vmatprep.subr.mxu0 0.0
    %258 = vmatpush1.msra.mxu0 0.0
    %259 = vmatprep.subr.mxu0 0.0
    %260 = vmatpush1.msra.mxu0 0.0
    %261 = vmatprep.subr.mxu0 0.0
    %262 = vmatpush1.msra.mxu0 0.0
    %263 = vmatprep.subr.mxu0 0.0
    %264 = vmatpush1.msra.mxu0 0.0
    %265 = vmatprep.subr.mxu0 0.0
    %266 = vmatpush1.msra.mxu0 0.0
    %267 = vmatprep.subr.mxu0 0.0
    %268 = vmatpush1.msra.mxu0 0.0
    %269 = vmatprep.subr.mxu0 0.0
    %270 = vmatpush1.msra.mxu0 0.0
    %271 = vmatprep.subr.mxu0 0.0
    %272 = vmatpush1.msra.mxu0 0.0
    %273 = vmatprep.subr.mxu0 0.0
    %274 = vmatpush1.msra.mxu0 0.0
    %275 = vmatprep.mubr.f32.mxu0 0.0
    %276 = vmatmul.mubr.f32.gmra.mrb[0].mxu0 %v82
    %v277 = vpop.f32.mrb[0].mxu0
    %v278 = vadd.f32 0.0, %v277
    %v279 = vpop.f32.mrb[0].mxu0
    %280 = vmatprep.mubr.f32.mxu0 0.0
    %281 = vmatmul.mubr.f32.gmra.mrb[0].mxu0 %v83
    %v282 = vpop.f32.mrb[0].mxu0
    %v283 = vadd.f32 0.0, %v282
    %v284 = vpop.f32.mrb[0].mxu0
    %285 = vdwg.mxu0
    %v286 = vld [vmem:[%s6] sm:$0x1]
    %v287 = vlaneseq
    %v288 = vshrl.u32 %v287, 7
    %v289 = vsub.s32 0, %v288
    %v290 = vrot.slane %v286, %v289
    %v291 = vadd.f32 %v201, %v290
    %v292 = vadd.f32 %v207, %v290
    %v293 = vld [vmem:[%s6 + $0x1] sm:$0x1]
    %v294 = vlaneseq
    %v295 = vshrl.u32 %v294, 7
    %v296 = vsub.s32 0, %v295
    %v297 = vrot.slane %v293, %v296
    %v298 = vadd.f32 %v203, %v297
    %v299 = vadd.f32 %v209, %v297
    %v300 = vld [vmem:[%s6 + $0x2] sm:$0x1]
    %v301 = vlaneseq
    %v302 = vshrl.u32 %v301, 7
    %v303 = vsub.s32 0, %v302
    %v304 = vrot.slane %v300, %v303
    %v305 = vadd.f32 %v278, %v304
    %v306 = vadd.f32 %v283, %v304
    %v307 = vld [vmem:[%s6 + $0xa] sm:$0x1]
    %v308 = vlaneseq
    %v309 = vshrl.u32 %v308, 7
    %v310 = vsub.s32 0, %v309
    %v311 = vrot.slane %v307, %v310
    %v312 = vmul.f32 %v298, %v311
    %v313 = vmul.f32 %v299, %v311
    %314 = vmatprep.subr.mxu0 0.0
    %315 = vmatpush1.xpose.msra.mxu0 %v312
    %316 = vmatprep.subr.mxu0 0.0
    %317 = vmatpush1.xpose.msra.mxu0 0.0
    %318 = vmatprep.subr.mxu0 0.0
    %319 = vmatpush1.xpose.msra.mxu0 0.0
    %320 = vmatprep.subr.mxu0 0.0
    %321 = vmatpush1.xpose.msra.mxu0 0.0
    %322 = vmatprep.subr.mxu0 0.0
    %323 = vmatpush1.xpose.msra.mxu0 0.0
    %324 = vmatprep.subr.mxu0 0.0
    %325 = vmatpush1.xpose.msra.mxu0 0.0
    %326 = vmatprep.subr.mxu0 0.0
    %327 = vmatpush1.xpose.msra.mxu0 0.0
    %328 = vmatprep.subr.mxu0 0.0
    %329 = vmatpush1.xpose.msra.mxu0 0.0
    %330 = vmatprep.subr.mxu0 0.0
    %331 = vmatpush1.xpose.msra.mxu0 0.0
    %332 = vmatprep.subr.mxu0 0.0
    %333 = vmatpush1.xpose.msra.mxu0 0.0
    %334 = vmatprep.subr.mxu0 0.0
    %335 = vmatpush1.xpose.msra.mxu0 0.0
    %336 = vmatprep.subr.mxu0 0.0
    %337 = vmatpush1.xpose.msra.mxu0 0.0
    %338 = vmatprep.subr.mxu0 0.0
    %339 = vmatpush1.xpose.msra.mxu0 0.0
    %340 = vmatprep.subr.mxu0 0.0
    %341 = vmatpush1.xpose.msra.mxu0 0.0
    %342 = vmatprep.subr.mxu0 0.0
    %343 = vmatpush1.xpose.msra.mxu0 0.0
    %344 = vmatprep.subr.mxu0 0.0
    %345 = vmatpush1.xpose.msra.mxu0 0.0
    %346 = vmatprep.subr.mxu0 0.0
    %347 = vmatpush1.xpose.msra.mxu0 0.0
    %348 = vmatprep.subr.mxu0 0.0
    %349 = vmatpush1.xpose.msra.mxu0 0.0
    %350 = vmatprep.subr.mxu0 0.0
    %351 = vmatpush1.xpose.msra.mxu0 0.0
    %352 = vmatprep.subr.mxu0 0.0
    %353 = vmatpush1.xpose.msra.mxu0 0.0
    %354 = vmatprep.subr.mxu0 0.0
    %355 = vmatpush1.xpose.msra.mxu0 0.0
    %356 = vmatprep.subr.mxu0 0.0
    %357 = vmatpush1.xpose.msra.mxu0 0.0
    %358 = vmatprep.subr.mxu0 0.0
    %359 = vmatpush1.xpose.msra.mxu0 0.0
    %360 = vmatprep.subr.mxu0 0.0
    %361 = vmatpush1.xpose.msra.mxu0 0.0
    %362 = vmatprep.subr.mxu0 0.0
    %363 = vmatpush1.xpose.msra.mxu0 0.0
    %364 = vmatprep.subr.mxu0 0.0
    %365 = vmatpush1.xpose.msra.mxu0 0.0
    %366 = vmatprep.subr.mxu0 0.0
    %367 = vmatpush1.xpose.msra.mxu0 0.0
    %368 = vmatprep.subr.mxu0 0.0
    %369 = vmatpush1.xpose.msra.mxu0 0.0
    %370 = vmatprep.subr.mxu0 0.0
    %371 = vmatpush1.xpose.msra.mxu0 0.0
    %372 = vmatprep.subr.mxu0 0.0
    %373 = vmatpush1.xpose.msra.mxu0 0.0
    %374 = vmatprep.subr.mxu0 0.0
    %375 = vmatpush1.xpose.msra.mxu0 0.0
    %376 = vmatprep.subr.mxu0 0.0
    %377 = vmatpush1.xpose.msra.mxu0 0.0
    %378 = vmatprep.mubr.f32.mxu0 0.0
    %379 = vmatmul.mubr.f32.gmra.mrb[0].mxu0 %v291
    %v380 = vpop.f32.mrb[0].mxu0
    %v381 = vadd.f32 %v84, %v380
    %v382 = vpop.f32.mrb[0].mxu0
    %383 = vdwg.mxu0
    %384 = vmatprep.subr.mxu0 0.0
    %385 = vmatpush1.xpose.msra.mxu0 %v313
    %386 = vmatprep.subr.mxu0 0.0
    %387 = vmatpush1.xpose.msra.mxu0 0.0
    %388 = vmatprep.subr.mxu0 0.0
    %389 = vmatpush1.xpose.msra.mxu0 0.0
    %390 = vmatprep.subr.mxu0 0.0
    %391 = vmatpush1.xpose.msra.mxu0 0.0
    %392 = vmatprep.subr.mxu0 0.0
    %393 = vmatpush1.xpose.msra.mxu0 0.0
    %394 = vmatprep.subr.mxu0 0.0
    %395 = vmatpush1.xpose.msra.mxu0 0.0
    %396 = vmatprep.subr.mxu0 0.0
    %397 = vmatpush1.xpose.msra.mxu0 0.0
    %398 = vmatprep.subr.mxu0 0.0
    %399 = vmatpush1.xpose.msra.mxu0 0.0
    %400 = vmatprep.subr.mxu0 0.0
    %401 = vmatpush1.xpose.msra.mxu0 0.0
    %402 = vmatprep.subr.mxu0 0.0
    %403 = vmatpush1.xpose.msra.mxu0 0.0
    %404 = vmatprep.subr.mxu0 0.0
    %405 = vmatpush1.xpose.msra.mxu0 0.0
    %406 = vmatprep.subr.mxu0 0.0
    %407 = vmatpush1.xpose.msra.mxu0 0.0
    %408 = vmatprep.subr.mxu0 0.0
    %409 = vmatpush1.xpose.msra.mxu0 0.0
    %410 = vmatprep.subr.mxu0 0.0
    %411 = vmatpush1.xpose.msra.mxu0 0.0
    %412 = vmatprep.subr.mxu0 0.0
    %413 = vmatpush1.xpose.msra.mxu0 0.0
    %414 = vmatprep.subr.mxu0 0.0
    %415 = vmatpush1.xpose.msra.mxu0 0.0
    %416 = vmatprep.subr.mxu0 0.0
    %417 = vmatpush1.xpose.msra.mxu0 0.0
    %418 = vmatprep.subr.mxu0 0.0
    %419 = vmatpush1.xpose.msra.mxu0 0.0
    %420 = vmatprep.subr.mxu0 0.0
    %421 = vmatpush1.xpose.msra.mxu0 0.0
    %422 = vmatprep.subr.mxu0 0.0
    %423 = vmatpush1.xpose.msra.mxu0 0.0
    %424 = vmatprep.subr.mxu0 0.0
    %425 = vmatpush1.xpose.msra.mxu0 0.0
    %426 = vmatprep.subr.mxu0 0.0
    %427 = vmatpush1.xpose.msra.mxu0 0.0
    %428 = vmatprep.subr.mxu0 0.0
    %429 = vmatpush1.xpose.msra.mxu0 0.0
    %430 = vmatprep.subr.mxu0 0.0
    %431 = vmatpush1.xpose.msra.mxu0 0.0
    %432 = vmatprep.subr.mxu0 0.0
    %433 = vmatpush1.xpose.msra.mxu0 0.0
    %434 = vmatprep.subr.mxu0 0.0
    %435 = vmatpush1.xpose.msra.mxu0 0.0
    %436 = vmatprep.subr.mxu0 0.0
    %437 = vmatpush1.xpose.msra.mxu0 0.0
    %438 = vmatprep.subr.mxu0 0.0
    %439 = vmatpush1.xpose.msra.mxu0 0.0
    %440 = vmatprep.subr.mxu0 0.0
    %441 = vmatpush1.xpose.msra.mxu0 0.0
    %442 = vmatprep.subr.mxu0 0.0
    %443 = vmatpush1.xpose.msra.mxu0 0.0
    %444 = vmatprep.subr.mxu0 0.0
    %445 = vmatpush1.xpose.msra.mxu0 0.0
    %446 = vmatprep.subr.mxu0 0.0
    %447 = vmatpush1.xpose.msra.mxu0 0.0
    %448 = vmatprep.mubr.f32.mxu0 0.0
    %449 = vmatmul.mubr.f32.gmra.mrb[0].mxu0 %v292
    %v450 = vpop.f32.mrb[0].mxu0
    %v451 = vadd.f32 %v85, %v450
    %v452 = vpop.f32.mrb[0].mxu0
    %453 = vdwg.mxu0
    %vm454 = vcmask 64512
    %v455 = vsel %vm454, %v381, -inf
    %456 = vmax.xlane.f32.xlu0 %v455
    %v457 = vpop.xlane.xlu0 %456
    %v458 = vsel %vm454, %v451, -inf
    %459 = vmax.xlane.f32.xlu0 %v458
    %v460 = vpop.xlane.xlu0 %459
    %v461 = vsub.f32 %v381, %v457
    %v462 = vsub.f32 %v451, %v460
    %v463 = vmul.f32 %v461, 1.442695
    %v464 = vpow.pop %v463
    %v465 = vmul.f32 %v462, 1.442695
    %v466 = vpow.pop %v465
    %v467 = vsel %vm454, %v464, 0.0
    %468 = vadd.xlane.f32.xlu0 %v467
    %v469 = vpop.xlane.xlu0 %468
    %v470 = vsel %vm454, %v466, 0.0
    %471 = vadd.xlane.f32.xlu0 %v470
    %v472 = vpop.xlane.xlu0 %471
    %v473 = vrcp.pop %v469
    %v474 = vrcp.pop %v472
    %v475 = vmul.f32 %v305, %v311
    %v476 = vmul.f32 %v306, %v311
    %v478 = vsel %vm454, %v464, 0
    %480 = vmatprep.subr.mxu0 0.0
    %481 = vmatpush1.msra.mxu0 %v475
    %482 = vmatprep.subr.mxu0 0.0
    %483 = vmatpush1.msra.mxu0 0.0
    %484 = vmatprep.subr.mxu0 0.0
    %485 = vmatpush1.msra.mxu0 0.0
    %486 = vmatprep.subr.mxu0 0.0
    %487 = vmatpush1.msra.mxu0 0.0
    %488 = vmatprep.subr.mxu0 0.0
    %489 = vmatpush1.msra.mxu0 0.0
    %490 = vmatprep.subr.mxu0 0.0
    %491 = vmatpush1.msra.mxu0 0.0
    %492 = vmatprep.subr.mxu0 0.0
    %493 = vmatpush1.msra.mxu0 0.0
    %494 = vmatprep.subr.mxu0 0.0
    %495 = vmatpush1.msra.mxu0 0.0
    %496 = vmatprep.subr.mxu0 0.0
    %497 = vmatpush1.msra.mxu0 0.0
    %498 = vmatprep.subr.mxu0 0.0
    %499 = vmatpush1.msra.mxu0 0.0
    %500 = vmatprep.subr.mxu0 0.0
    %501 = vmatpush1.msra.mxu0 0.0
    %502 = vmatprep.subr.mxu0 0.0
    %503 = vmatpush1.msra.mxu0 0.0
    %504 = vmatprep.subr.mxu0 0.0
    %505 = vmatpush1.msra.mxu0 0.0
    %506 = vmatprep.subr.mxu0 0.0
    %507 = vmatpush1.msra.mxu0 0.0
    %508 = vmatprep.subr.mxu0 0.0
    %509 = vmatpush1.msra.mxu0 0.0
    %510 = vmatprep.subr.mxu0 0.0
    %511 = vmatpush1.msra.mxu0 0.0
    %512 = vmatprep.subr.mxu0 0.0
    %513 = vmatpush1.msra.mxu0 0.0
    %514 = vmatprep.subr.mxu0 0.0
    %515 = vmatpush1.msra.mxu0 0.0
    %516 = vmatprep.subr.mxu0 0.0
    %517 = vmatpush1.msra.mxu0 0.0
    %518 = vmatprep.subr.mxu0 0.0
    %519 = vmatpush1.msra.mxu0 0.0
    %520 = vmatprep.subr.mxu0 0.0
    %521 = vmatpush1.msra.mxu0 0.0
    %522 = vmatprep.subr.mxu0 0.0
    %523 = vmatpush1.msra.mxu0 0.0
    %524 = vmatprep.subr.mxu0 0.0
    %525 = vmatpush1.msra.mxu0 0.0
    %526 = vmatprep.subr.mxu0 0.0
    %527 = vmatpush1.msra.mxu0 0.0
    %528 = vmatprep.subr.mxu0 0.0
    %529 = vmatpush1.msra.mxu0 0.0
    %530 = vmatprep.subr.mxu0 0.0
    %531 = vmatpush1.msra.mxu0 0.0
    %532 = vmatprep.subr.mxu0 0.0
    %533 = vmatpush1.msra.mxu0 0.0
    %534 = vmatprep.subr.mxu0 0.0
    %535 = vmatpush1.msra.mxu0 0.0
    %536 = vmatprep.subr.mxu0 0.0
    %537 = vmatpush1.msra.mxu0 0.0
    %538 = vmatprep.subr.mxu0 0.0
    %539 = vmatpush1.msra.mxu0 0.0
    %540 = vmatprep.subr.mxu0 0.0
    %541 = vmatpush1.msra.mxu0 0.0
    %542 = vmatprep.subr.mxu0 0.0
    %543 = vmatpush1.msra.mxu0 0.0
    %544 = vmatprep.mubr.f32.mxu0 0.0
    %545 = vmatmul.mubr.f32.gmra.mrb[0].mxu0 %v478
    %v546 = vpop.f32.mrb[0].mxu0
    %v547 = vadd.f32 0.0, %v546
    %v548 = vpop.f32.mrb[0].mxu0
    %549 = vdwg.mxu0
    %v551 = vsel %vm454, %v466, 0
    %553 = vmatprep.subr.mxu0 0.0
    %554 = vmatpush1.msra.mxu0 %v476
    %555 = vmatprep.subr.mxu0 0.0
    %556 = vmatpush1.msra.mxu0 0.0
    %557 = vmatprep.subr.mxu0 0.0
    %558 = vmatpush1.msra.mxu0 0.0
    %559 = vmatprep.subr.mxu0 0.0
    %560 = vmatpush1.msra.mxu0 0.0
    %561 = vmatprep.subr.mxu0 0.0
    %562 = vmatpush1.msra.mxu0 0.0
    %563 = vmatprep.subr.mxu0 0.0
    %564 = vmatpush1.msra.mxu0 0.0
    %565 = vmatprep.subr.mxu0 0.0
    %566 = vmatpush1.msra.mxu0 0.0
    %567 = vmatprep.subr.mxu0 0.0
    %568 = vmatpush1.msra.mxu0 0.0
    %569 = vmatprep.subr.mxu0 0.0
    %570 = vmatpush1.msra.mxu0 0.0
    %571 = vmatprep.subr.mxu0 0.0
    %572 = vmatpush1.msra.mxu0 0.0
    %573 = vmatprep.subr.mxu0 0.0
    %574 = vmatpush1.msra.mxu0 0.0
    %575 = vmatprep.subr.mxu0 0.0
    %576 = vmatpush1.msra.mxu0 0.0
    %577 = vmatprep.subr.mxu0 0.0
    %578 = vmatpush1.msra.mxu0 0.0
    %579 = vmatprep.subr.mxu0 0.0
    %580 = vmatpush1.msra.mxu0 0.0
    %581 = vmatprep.subr.mxu0 0.0
    %582 = vmatpush1.msra.mxu0 0.0
    %583 = vmatprep.subr.mxu0 0.0
    %584 = vmatpush1.msra.mxu0 0.0
    %585 = vmatprep.subr.mxu0 0.0
    %586 = vmatpush1.msra.mxu0 0.0
    %587 = vmatprep.subr.mxu0 0.0
    %588 = vmatpush1.msra.mxu0 0.0
    %589 = vmatprep.subr.mxu0 0.0
    %590 = vmatpush1.msra.mxu0 0.0
    %591 = vmatprep.subr.mxu0 0.0
    %592 = vmatpush1.msra.mxu0 0.0
    %593 = vmatprep.subr.mxu0 0.0
    %594 = vmatpush1.msra.mxu0 0.0
    %595 = vmatprep.subr.mxu0 0.0
    %596 = vmatpush1.msra.mxu0 0.0
    %597 = vmatprep.subr.mxu0 0.0
    %598 = vmatpush1.msra.mxu0 0.0
    %599 = vmatprep.subr.mxu0 0.0
    %600 = vmatpush1.msra.mxu0 0.0
    %601 = vmatprep.subr.mxu0 0.0
    %602 = vmatpush1.msra.mxu0 0.0
    %603 = vmatprep.subr.mxu0 0.0
    %604 = vmatpush1.msra.mxu0 0.0
    %605 = vmatprep.subr.mxu0 0.0
    %606 = vmatpush1.msra.mxu0 0.0
    %607 = vmatprep.subr.mxu0 0.0
    %608 = vmatpush1.msra.mxu0 0.0
    %609 = vmatprep.subr.mxu0 0.0
    %610 = vmatpush1.msra.mxu0 0.0
    %611 = vmatprep.subr.mxu0 0.0
    %612 = vmatpush1.msra.mxu0 0.0
    %613 = vmatprep.subr.mxu0 0.0
    %614 = vmatpush1.msra.mxu0 0.0
    %615 = vmatprep.subr.mxu0 0.0
    %616 = vmatpush1.msra.mxu0 0.0
    %617 = vmatprep.mubr.f32.mxu0 0.0
    %618 = vmatmul.mubr.f32.gmra.mrb[0].mxu0 %v551
    %v619 = vpop.f32.mrb[0].mxu0
    %v620 = vadd.f32 0.0, %v619
    %v621 = vpop.f32.mrb[0].mxu0
    %622 = vdwg.mxu0
    %v623 = vmul.f32 %v547, %v473
    %v624 = vmul.f32 %v620, %v474
    %v625 = vadd.f32 %v623, 0.0
    %v626 = vadd.f32 %v624, 0.0
    %v627 = vld [vmem:[%s6 + $0xb] sm:$0x1]
    %v628 = vlaneseq
    %v629 = vshrl.u32 %v628, 7
    %v630 = vsub.s32 0, %v629
    %v631 = vrot.slane %v627, %v630
    %v632 = vmul.f32 %v298, %v631
    %v633 = vmul.f32 %v299, %v631
    %634 = vmatprep.subr.mxu0 0.0
    %635 = vmatpush1.xpose.msra.mxu0 %v632
    %636 = vmatprep.subr.mxu0 0.0
    %637 = vmatpush1.xpose.msra.mxu0 0.0
    %638 = vmatprep.subr.mxu0 0.0
    %639 = vmatpush1.xpose.msra.mxu0 0.0
    %640 = vmatprep.subr.mxu0 0.0
    %641 = vmatpush1.xpose.msra.mxu0 0.0
    %642 = vmatprep.subr.mxu0 0.0
    %643 = vmatpush1.xpose.msra.mxu0 0.0
    %644 = vmatprep.subr.mxu0 0.0
    %645 = vmatpush1.xpose.msra.mxu0 0.0
    %646 = vmatprep.subr.mxu0 0.0
    %647 = vmatpush1.xpose.msra.mxu0 0.0
    %648 = vmatprep.subr.mxu0 0.0
    %649 = vmatpush1.xpose.msra.mxu0 0.0
    %650 = vmatprep.subr.mxu0 0.0
    %651 = vmatpush1.xpose.msra.mxu0 0.0
    %652 = vmatprep.subr.mxu0 0.0
    %653 = vmatpush1.xpose.msra.mxu0 0.0
    %654 = vmatprep.subr.mxu0 0.0
    %655 = vmatpush1.xpose.msra.mxu0 0.0
    %656 = vmatprep.subr.mxu0 0.0
    %657 = vmatpush1.xpose.msra.mxu0 0.0
    %658 = vmatprep.subr.mxu0 0.0
    %659 = vmatpush1.xpose.msra.mxu0 0.0
    %660 = vmatprep.subr.mxu0 0.0
    %661 = vmatpush1.xpose.msra.mxu0 0.0
    %662 = vmatprep.subr.mxu0 0.0
    %663 = vmatpush1.xpose.msra.mxu0 0.0
    %664 = vmatprep.subr.mxu0 0.0
    %665 = vmatpush1.xpose.msra.mxu0 0.0
    %666 = vmatprep.subr.mxu0 0.0
    %667 = vmatpush1.xpose.msra.mxu0 0.0
    %668 = vmatprep.subr.mxu0 0.0
    %669 = vmatpush1.xpose.msra.mxu0 0.0
    %670 = vmatprep.subr.mxu0 0.0
    %671 = vmatpush1.xpose.msra.mxu0 0.0
    %672 = vmatprep.subr.mxu0 0.0
    %673 = vmatpush1.xpose.msra.mxu0 0.0
    %674 = vmatprep.subr.mxu0 0.0
    %675 = vmatpush1.xpose.msra.mxu0 0.0
    %676 = vmatprep.subr.mxu0 0.0
    %677 = vmatpush1.xpose.msra.mxu0 0.0
    %678 = vmatprep.subr.mxu0 0.0
    %679 = vmatpush1.xpose.msra.mxu0 0.0
    %680 = vmatprep.subr.mxu0 0.0
    %681 = vmatpush1.xpose.msra.mxu0 0.0
    %682 = vmatprep.subr.mxu0 0.0
    %683 = vmatpush1.xpose.msra.mxu0 0.0
    %684 = vmatprep.subr.mxu0 0.0
    %685 = vmatpush1.xpose.msra.mxu0 0.0
    %686 = vmatprep.subr.mxu0 0.0
    %687 = vmatpush1.xpose.msra.mxu0 0.0
    %688 = vmatprep.subr.mxu0 0.0
    %689 = vmatpush1.xpose.msra.mxu0 0.0
    %690 = vmatprep.subr.mxu0 0.0
    %691 = vmatpush1.xpose.msra.mxu0 0.0
    %692 = vmatprep.subr.mxu0 0.0
    %693 = vmatpush1.xpose.msra.mxu0 0.0
    %694 = vmatprep.subr.mxu0 0.0
    %695 = vmatpush1.xpose.msra.mxu0 0.0
    %696 = vmatprep.subr.mxu0 0.0
    %697 = vmatpush1.xpose.msra.mxu0 0.0
    %698 = vmatprep.mubr.f32.mxu0 0.0
    %699 = vmatmul.mubr.f32.gmra.mrb[0].mxu0 %v291
    %v700 = vpop.f32.mrb[0].mxu0
    %v701 = vadd.f32 %v84, %v700
    %v702 = vpop.f32.mrb[0].mxu0
    %703 = vdwg.mxu0
    %704 = vmatprep.subr.mxu0 0.0
    %705 = vmatpush1.xpose.msra.mxu0 %v633
    %706 = vmatprep.subr.mxu0 0.0
    %707 = vmatpush1.xpose.msra.mxu0 0.0
    %708 = vmatprep.subr.mxu0 0.0
    %709 = vmatpush1.xpose.msra.mxu0 0.0
    %710 = vmatprep.subr.mxu0 0.0
    %711 = vmatpush1.xpose.msra.mxu0 0.0
    %712 = vmatprep.subr.mxu0 0.0
    %713 = vmatpush1.xpose.msra.mxu0 0.0
    %714 = vmatprep.subr.mxu0 0.0
    %715 = vmatpush1.xpose.msra.mxu0 0.0
    %716 = vmatprep.subr.mxu0 0.0
    %717 = vmatpush1.xpose.msra.mxu0 0.0
    %718 = vmatprep.subr.mxu0 0.0
    %719 = vmatpush1.xpose.msra.mxu0 0.0
    %720 = vmatprep.subr.mxu0 0.0
    %721 = vmatpush1.xpose.msra.mxu0 0.0
    %722 = vmatprep.subr.mxu0 0.0
    %723 = vmatpush1.xpose.msra.mxu0 0.0
    %724 = vmatprep.subr.mxu0 0.0
    %725 = vmatpush1.xpose.msra.mxu0 0.0
    %726 = vmatprep.subr.mxu0 0.0
    %727 = vmatpush1.xpose.msra.mxu0 0.0
    %728 = vmatprep.subr.mxu0 0.0
    %729 = vmatpush1.xpose.msra.mxu0 0.0
    %730 = vmatprep.subr.mxu0 0.0
    %731 = vmatpush1.xpose.msra.mxu0 0.0
    %732 = vmatprep.subr.mxu0 0.0
    %733 = vmatpush1.xpose.msra.mxu0 0.0
    %734 = vmatprep.subr.mxu0 0.0
    %735 = vmatpush1.xpose.msra.mxu0 0.0
    %736 = vmatprep.subr.mxu0 0.0
    %737 = vmatpush1.xpose.msra.mxu0 0.0
    %738 = vmatprep.subr.mxu0 0.0
    %739 = vmatpush1.xpose.msra.mxu0 0.0
    %740 = vmatprep.subr.mxu0 0.0
    %741 = vmatpush1.xpose.msra.mxu0 0.0
    %742 = vmatprep.subr.mxu0 0.0
    %743 = vmatpush1.xpose.msra.mxu0 0.0
    %744 = vmatprep.subr.mxu0 0.0
    %745 = vmatpush1.xpose.msra.mxu0 0.0
    %746 = vmatprep.subr.mxu0 0.0
    %747 = vmatpush1.xpose.msra.mxu0 0.0
    %748 = vmatprep.subr.mxu0 0.0
    %749 = vmatpush1.xpose.msra.mxu0 0.0
    %750 = vmatprep.subr.mxu0 0.0
    %751 = vmatpush1.xpose.msra.mxu0 0.0
    %752 = vmatprep.subr.mxu0 0.0
    %753 = vmatpush1.xpose.msra.mxu0 0.0
    %754 = vmatprep.subr.mxu0 0.0
    %755 = vmatpush1.xpose.msra.mxu0 0.0
    %756 = vmatprep.subr.mxu0 0.0
    %757 = vmatpush1.xpose.msra.mxu0 0.0
    %758 = vmatprep.subr.mxu0 0.0
    %759 = vmatpush1.xpose.msra.mxu0 0.0
    %760 = vmatprep.subr.mxu0 0.0
    %761 = vmatpush1.xpose.msra.mxu0 0.0
    %762 = vmatprep.subr.mxu0 0.0
    %763 = vmatpush1.xpose.msra.mxu0 0.0
    %764 = vmatprep.subr.mxu0 0.0
    %765 = vmatpush1.xpose.msra.mxu0 0.0
    %766 = vmatprep.subr.mxu0 0.0
    %767 = vmatpush1.xpose.msra.mxu0 0.0
    %768 = vmatprep.mubr.f32.mxu0 0.0
    %769 = vmatmul.mubr.f32.gmra.mrb[0].mxu0 %v292
    %v770 = vpop.f32.mrb[0].mxu0
    %v771 = vadd.f32 %v85, %v770
    %v772 = vpop.f32.mrb[0].mxu0
    %773 = vdwg.mxu0
    %v774 = vsel %vm454, %v701, -inf
    %775 = vmax.xlane.f32.xlu0 %v774
    %v776 = vpop.xlane.xlu0 %775
    %v777 = vsel %vm454, %v771, -inf
    %778 = vmax.xlane.f32.xlu0 %v777
    %v779 = vpop.xlane.xlu0 %778
    %v780 = vsub.f32 %v701, %v776
    %v781 = vsub.f32 %v771, %v779
    %v782 = vmul.f32 %v780, 1.442695
    %v783 = vpow.pop %v782
    %v784 = vmul.f32 %v781, 1.442695
    %v785 = vpow.pop %v784
    %v786 = vsel %vm454, %v783, 0.0
    %787 = vadd.xlane.f32.xlu0 %v786
    %v788 = vpop.xlane.xlu0 %787
    %v789 = vsel %vm454, %v785, 0.0
    %790 = vadd.xlane.f32.xlu0 %v789
    %v791 = vpop.xlane.xlu0 %790
    %v792 = vrcp.pop %v788
    %v793 = vrcp.pop %v791
    %v794 = vmul.f32 %v305, %v631
    %v795 = vmul.f32 %v306, %v631
    %v797 = vsel %vm454, %v783, 0
    %799 = vmatprep.subr.mxu0 0.0
    %800 = vmatpush1.msra.mxu0 %v794
    %801 = vmatprep.subr.mxu0 0.0
    %802 = vmatpush1.msra.mxu0 0.0
    %803 = vmatprep.subr.mxu0 0.0
    %804 = vmatpush1.msra.mxu0 0.0
    %805 = vmatprep.subr.mxu0 0.0
    %806 = vmatpush1.msra.mxu0 0.0
    %807 = vmatprep.subr.mxu0 0.0
    %808 = vmatpush1.msra.mxu0 0.0
    %809 = vmatprep.subr.mxu0 0.0
    %810 = vmatpush1.msra.mxu0 0.0
    %811 = vmatprep.subr.mxu0 0.0
    %812 = vmatpush1.msra.mxu0 0.0
    %813 = vmatprep.subr.mxu0 0.0
    %814 = vmatpush1.msra.mxu0 0.0
    %815 = vmatprep.subr.mxu0 0.0
    %816 = vmatpush1.msra.mxu0 0.0
    %817 = vmatprep.subr.mxu0 0.0
    %818 = vmatpush1.msra.mxu0 0.0
    %819 = vmatprep.subr.mxu0 0.0
    %820 = vmatpush1.msra.mxu0 0.0
    %821 = vmatprep.subr.mxu0 0.0
    %822 = vmatpush1.msra.mxu0 0.0
    %823 = vmatprep.subr.mxu0 0.0
    %824 = vmatpush1.msra.mxu0 0.0
    %825 = vmatprep.subr.mxu0 0.0
    %826 = vmatpush1.msra.mxu0 0.0
    %827 = vmatprep.subr.mxu0 0.0
    %828 = vmatpush1.msra.mxu0 0.0
    %829 = vmatprep.subr.mxu0 0.0
    %830 = vmatpush1.msra.mxu0 0.0
    %831 = vmatprep.subr.mxu0 0.0
    %832 = vmatpush1.msra.mxu0 0.0
    %833 = vmatprep.subr.mxu0 0.0
    %834 = vmatpush1.msra.mxu0 0.0
    %835 = vmatprep.subr.mxu0 0.0
    %836 = vmatpush1.msra.mxu0 0.0
    %837 = vmatprep.subr.mxu0 0.0
    %838 = vmatpush1.msra.mxu0 0.0
    %839 = vmatprep.subr.mxu0 0.0
    %840 = vmatpush1.msra.mxu0 0.0
    %841 = vmatprep.subr.mxu0 0.0
    %842 = vmatpush1.msra.mxu0 0.0
    %843 = vmatprep.subr.mxu0 0.0
    %844 = vmatpush1.msra.mxu0 0.0
    %845 = vmatprep.subr.mxu0 0.0
    %846 = vmatpush1.msra.mxu0 0.0
    %847 = vmatprep.subr.mxu0 0.0
    %848 = vmatpush1.msra.mxu0 0.0
    %849 = vmatprep.subr.mxu0 0.0
    %850 = vmatpush1.msra.mxu0 0.0
    %851 = vmatprep.subr.mxu0 0.0
    %852 = vmatpush1.msra.mxu0 0.0
    %853 = vmatprep.subr.mxu0 0.0
    %854 = vmatpush1.msra.mxu0 0.0
    %855 = vmatprep.subr.mxu0 0.0
    %856 = vmatpush1.msra.mxu0 0.0
    %857 = vmatprep.subr.mxu0 0.0
    %858 = vmatpush1.msra.mxu0 0.0
    %859 = vmatprep.subr.mxu0 0.0
    %860 = vmatpush1.msra.mxu0 0.0
    %861 = vmatprep.subr.mxu0 0.0
    %862 = vmatpush1.msra.mxu0 0.0
    %863 = vmatprep.mubr.f32.mxu0 0.0
    %864 = vmatmul.mubr.f32.gmra.mrb[0].mxu0 %v797
    %v865 = vpop.f32.mrb[0].mxu0
    %v866 = vadd.f32 0.0, %v865
    %v867 = vpop.f32.mrb[0].mxu0
    %868 = vdwg.mxu0
    %v870 = vsel %vm454, %v785, 0
    %872 = vmatprep.subr.mxu0 0.0
    %873 = vmatpush1.msra.mxu0 %v795
    %874 = vmatprep.subr.mxu0 0.0
    %875 = vmatpush1.msra.mxu0 0.0
    %876 = vmatprep.subr.mxu0 0.0
    %877 = vmatpush1.msra.mxu0 0.0
    %878 = vmatprep.subr.mxu0 0.0
    %879 = vmatpush1.msra.mxu0 0.0
    %880 = vmatprep.subr.mxu0 0.0
    %881 = vmatpush1.msra.mxu0 0.0
    %882 = vmatprep.subr.mxu0 0.0
    %883 = vmatpush1.msra.mxu0 0.0
    %884 = vmatprep.subr.mxu0 0.0
    %885 = vmatpush1.msra.mxu0 0.0
    %886 = vmatprep.subr.mxu0 0.0
    %887 = vmatpush1.msra.mxu0 0.0
    %888 = vmatprep.subr.mxu0 0.0
    %889 = vmatpush1.msra.mxu0 0.0
    %890 = vmatprep.subr.mxu0 0.0
    %891 = vmatpush1.msra.mxu0 0.0
    %892 = vmatprep.subr.mxu0 0.0
    %893 = vmatpush1.msra.mxu0 0.0
    %894 = vmatprep.subr.mxu0 0.0
    %895 = vmatpush1.msra.mxu0 0.0
    %896 = vmatprep.subr.mxu0 0.0
    %897 = vmatpush1.msra.mxu0 0.0
    %898 = vmatprep.subr.mxu0 0.0
    %899 = vmatpush1.msra.mxu0 0.0
    %900 = vmatprep.subr.mxu0 0.0
    %901 = vmatpush1.msra.mxu0 0.0
    %902 = vmatprep.subr.mxu0 0.0
    %903 = vmatpush1.msra.mxu0 0.0
    %904 = vmatprep.subr.mxu0 0.0
    %905 = vmatpush1.msra.mxu0 0.0
    %906 = vmatprep.subr.mxu0 0.0
    %907 = vmatpush1.msra.mxu0 0.0
    %908 = vmatprep.subr.mxu0 0.0
    %909 = vmatpush1.msra.mxu0 0.0
    %910 = vmatprep.subr.mxu0 0.0
    %911 = vmatpush1.msra.mxu0 0.0
    %912 = vmatprep.subr.mxu0 0.0
    %913 = vmatpush1.msra.mxu0 0.0
    %914 = vmatprep.subr.mxu0 0.0
    %915 = vmatpush1.msra.mxu0 0.0
    %916 = vmatprep.subr.mxu0 0.0
    %917 = vmatpush1.msra.mxu0 0.0
    %918 = vmatprep.subr.mxu0 0.0
    %919 = vmatpush1.msra.mxu0 0.0
    %920 = vmatprep.subr.mxu0 0.0
    %921 = vmatpush1.msra.mxu0 0.0
    %922 = vmatprep.subr.mxu0 0.0
    %923 = vmatpush1.msra.mxu0 0.0
    %924 = vmatprep.subr.mxu0 0.0
    %925 = vmatpush1.msra.mxu0 0.0
    %926 = vmatprep.subr.mxu0 0.0
    %927 = vmatpush1.msra.mxu0 0.0
    %928 = vmatprep.subr.mxu0 0.0
    %929 = vmatpush1.msra.mxu0 0.0
    %930 = vmatprep.subr.mxu0 0.0
    %931 = vmatpush1.msra.mxu0 0.0
    %932 = vmatprep.subr.mxu0 0.0
    %933 = vmatpush1.msra.mxu0 0.0
    %934 = vmatprep.subr.mxu0 0.0
    %935 = vmatpush1.msra.mxu0 0.0
    %936 = vmatprep.mubr.f32.mxu0 0.0
    %937 = vmatmul.mubr.f32.gmra.mrb[0].mxu0 %v870
    %v938 = vpop.f32.mrb[0].mxu0
    %v939 = vadd.f32 0.0, %v938
    %v940 = vpop.f32.mrb[0].mxu0
    %941 = vdwg.mxu0
    %v942 = vmul.f32 %v866, %v792
    %v943 = vmul.f32 %v939, %v793
    %v944 = vadd.f32 %v625, %v942
    %v945 = vadd.f32 %v626, %v943
    %v946 = vld [vmem:[%s6 + $0xc] sm:$0x1]
    %v947 = vlaneseq
    %v948 = vshrl.u32 %v947, 7
    %v949 = vsub.s32 0, %v948
    %v950 = vrot.slane %v946, %v949
    %v951 = vmul.f32 %v298, %v950
    %v952 = vmul.f32 %v299, %v950
    %953 = vmatprep.subr.mxu0 0.0
    %954 = vmatpush1.xpose.msra.mxu0 %v951
    %955 = vmatprep.subr.mxu0 0.0
    %956 = vmatpush1.xpose.msra.mxu0 0.0
    %957 = vmatprep.subr.mxu0 0.0
    %958 = vmatpush1.xpose.msra.mxu0 0.0
    %959 = vmatprep.subr.mxu0 0.0
    %960 = vmatpush1.xpose.msra.mxu0 0.0
    %961 = vmatprep.subr.mxu0 0.0
    %962 = vmatpush1.xpose.msra.mxu0 0.0
    %963 = vmatprep.subr.mxu0 0.0
    %964 = vmatpush1.xpose.msra.mxu0 0.0
    %965 = vmatprep.subr.mxu0 0.0
    %966 = vmatpush1.xpose.msra.mxu0 0.0
    %967 = vmatprep.subr.mxu0 0.0
    %968 = vmatpush1.xpose.msra.mxu0 0.0
    %969 = vmatprep.subr.mxu0 0.0
    %970 = vmatpush1.xpose.msra.mxu0 0.0
    %971 = vmatprep.subr.mxu0 0.0
    %972 = vmatpush1.xpose.msra.mxu0 0.0
    %973 = vmatprep.subr.mxu0 0.0
    %974 = vmatpush1.xpose.msra.mxu0 0.0
    %975 = vmatprep.subr.mxu0 0.0
    %976 = vmatpush1.xpose.msra.mxu0 0.0
    %977 = vmatprep.subr.mxu0 0.0
    %978 = vmatpush1.xpose.msra.mxu0 0.0
    %979 = vmatprep.subr.mxu0 0.0
    %980 = vmatpush1.xpose.msra.mxu0 0.0
    %981 = vmatprep.subr.mxu0 0.0
    %982 = vmatpush1.xpose.msra.mxu0 0.0
    %983 = vmatprep.subr.mxu0 0.0
    %984 = vmatpush1.xpose.msra.mxu0 0.0
    %985 = vmatprep.subr.mxu0 0.0
    %986 = vmatpush1.xpose.msra.mxu0 0.0
    %987 = vmatprep.subr.mxu0 0.0
    %988 = vmatpush1.xpose.msra.mxu0 0.0
    %989 = vmatprep.subr.mxu0 0.0
    %990 = vmatpush1.xpose.msra.mxu0 0.0
    %991 = vmatprep.subr.mxu0 0.0
    %992 = vmatpush1.xpose.msra.mxu0 0.0
    %993 = vmatprep.subr.mxu0 0.0
    %994 = vmatpush1.xpose.msra.mxu0 0.0
    %995 = vmatprep.subr.mxu0 0.0
    %996 = vmatpush1.xpose.msra.mxu0 0.0
    %997 = vmatprep.subr.mxu0 0.0
    %998 = vmatpush1.xpose.msra.mxu0 0.0
    %999 = vmatprep.subr.mxu0 0.0
    %1000 = vmatpush1.xpose.msra.mxu0 0.0
    %1001 = vmatprep.subr.mxu0 0.0
    %1002 = vmatpush1.xpose.msra.mxu0 0.0
    %1003 = vmatprep.subr.mxu0 0.0
    %1004 = vmatpush1.xpose.msra.mxu0 0.0
    %1005 = vmatprep.subr.mxu0 0.0
    %1006 = vmatpush1.xpose.msra.mxu0 0.0
    %1007 = vmatprep.subr.mxu0 0.0
    %1008 = vmatpush1.xpose.msra.mxu0 0.0
    %1009 = vmatprep.subr.mxu0 0.0
    %1010 = vmatpush1.xpose.msra.mxu0 0.0
    %1011 = vmatprep.subr.mxu0 0.0
    %1012 = vmatpush1.xpose.msra.mxu0 0.0
    %1013 = vmatprep.subr.mxu0 0.0
    %1014 = vmatpush1.xpose.msra.mxu0 0.0
    %1015 = vmatprep.subr.mxu0 0.0
    %1016 = vmatpush1.xpose.msra.mxu0 0.0
    %1017 = vmatprep.mubr.f32.mxu0 0.0
    %1018 = vmatmul.mubr.f32.gmra.mrb[0].mxu0 %v291
    %v1019 = vpop.f32.mrb[0].mxu0
    %v1020 = vadd.f32 %v84, %v1019
    %v1021 = vpop.f32.mrb[0].mxu0
    %1022 = vdwg.mxu0
    %1023 = vmatprep.subr.mxu0 0.0
    %1024 = vmatpush1.xpose.msra.mxu0 %v952
    %1025 = vmatprep.subr.mxu0 0.0
    %1026 = vmatpush1.xpose.msra.mxu0 0.0
    %1027 = vmatprep.subr.mxu0 0.0
    %1028 = vmatpush1.xpose.msra.mxu0 0.0
    %1029 = vmatprep.subr.mxu0 0.0
    %1030 = vmatpush1.xpose.msra.mxu0 0.0
    %1031 = vmatprep.subr.mxu0 0.0
    %1032 = vmatpush1.xpose.msra.mxu0 0.0
    %1033 = vmatprep.subr.mxu0 0.0
    %1034 = vmatpush1.xpose.msra.mxu0 0.0
    %1035 = vmatprep.subr.mxu0 0.0
    %1036 = vmatpush1.xpose.msra.mxu0 0.0
    %1037 = vmatprep.subr.mxu0 0.0
    %1038 = vmatpush1.xpose.msra.mxu0 0.0
    %1039 = vmatprep.subr.mxu0 0.0
    %1040 = vmatpush1.xpose.msra.mxu0 0.0
    %1041 = vmatprep.subr.mxu0 0.0
    %1042 = vmatpush1.xpose.msra.mxu0 0.0
    %1043 = vmatprep.subr.mxu0 0.0
    %1044 = vmatpush1.xpose.msra.mxu0 0.0
    %1045 = vmatprep.subr.mxu0 0.0
    %1046 = vmatpush1.xpose.msra.mxu0 0.0
    %1047 = vmatprep.subr.mxu0 0.0
    %1048 = vmatpush1.xpose.msra.mxu0 0.0
    %1049 = vmatprep.subr.mxu0 0.0
    %1050 = vmatpush1.xpose.msra.mxu0 0.0
    %1051 = vmatprep.subr.mxu0 0.0
    %1052 = vmatpush1.xpose.msra.mxu0 0.0
    %1053 = vmatprep.subr.mxu0 0.0
    %1054 = vmatpush1.xpose.msra.mxu0 0.0
    %1055 = vmatprep.subr.mxu0 0.0
    %1056 = vmatpush1.xpose.msra.mxu0 0.0
    %1057 = vmatprep.subr.mxu0 0.0
    %1058 = vmatpush1.xpose.msra.mxu0 0.0
    %1059 = vmatprep.subr.mxu0 0.0
    %1060 = vmatpush1.xpose.msra.mxu0 0.0
    %1061 = vmatprep.subr.mxu0 0.0
    %1062 = vmatpush1.xpose.msra.mxu0 0.0
    %1063 = vmatprep.subr.mxu0 0.0
    %1064 = vmatpush1.xpose.msra.mxu0 0.0
    %1065 = vmatprep.subr.mxu0 0.0
    %1066 = vmatpush1.xpose.msra.mxu0 0.0
    %1067 = vmatprep.subr.mxu0 0.0
    %1068 = vmatpush1.xpose.msra.mxu0 0.0
    %1069 = vmatprep.subr.mxu0 0.0
    %1070 = vmatpush1.xpose.msra.mxu0 0.0
    %1071 = vmatprep.subr.mxu0 0.0
    %1072 = vmatpush1.xpose.msra.mxu0 0.0
    %1073 = vmatprep.subr.mxu0 0.0
    %1074 = vmatpush1.xpose.msra.mxu0 0.0
    %1075 = vmatprep.subr.mxu0 0.0
    %1076 = vmatpush1.xpose.msra.mxu0 0.0
    %1077 = vmatprep.subr.mxu0 0.0
    %1078 = vmatpush1.xpose.msra.mxu0 0.0
    %1079 = vmatprep.subr.mxu0 0.0
    %1080 = vmatpush1.xpose.msra.mxu0 0.0
    %1081 = vmatprep.subr.mxu0 0.0
    %1082 = vmatpush1.xpose.msra.mxu0 0.0
    %1083 = vmatprep.subr.mxu0 0.0
    %1084 = vmatpush1.xpose.msra.mxu0 0.0
    %1085 = vmatprep.subr.mxu0 0.0
    %1086 = vmatpush1.xpose.msra.mxu0 0.0
    %1087 = vmatprep.mubr.f32.mxu0 0.0
    %1088 = vmatmul.mubr.f32.gmra.mrb[0].mxu0 %v292
    %v1089 = vpop.f32.mrb[0].mxu0
    %v1090 = vadd.f32 %v85, %v1089
    %v1091 = vpop.f32.mrb[0].mxu0
    %1092 = vdwg.mxu0
    %v1093 = vsel %vm454, %v1020, -inf
    %1094 = vmax.xlane.f32.xlu0 %v1093
    %v1095 = vpop.xlane.xlu0 %1094
    %v1096 = vsel %vm454, %v1090, -inf
    %1097 = vmax.xlane.f32.xlu0 %v1096
    %v1098 = vpop.xlane.xlu0 %1097
    %v1099 = vsub.f32 %v1020, %v1095
    %v1100 = vsub.f32 %v1090, %v1098
    %v1101 = vmul.f32 %v1099, 1.442695
    %v1102 = vpow.pop %v1101
    %v1103 = vmul.f32 %v1100, 1.442695
    %v1104 = vpow.pop %v1103
    %v1105 = vsel %vm454, %v1102, 0.0
    %1106 = vadd.xlane.f32.xlu0 %v1105
    %v1107 = vpop.xlane.xlu0 %1106
    %v1108 = vsel %vm454, %v1104, 0.0
    %1109 = vadd.xlane.f32.xlu0 %v1108
    %v1110 = vpop.xlane.xlu0 %1109
    %v1111 = vrcp.pop %v1107
    %v1112 = vrcp.pop %v1110
    %v1113 = vmul.f32 %v305, %v950
    %v1114 = vmul.f32 %v306, %v950
    %v1116 = vsel %vm454, %v1102, 0
    %1118 = vmatprep.subr.mxu0 0.0
    %1119 = vmatpush1.msra.mxu0 %v1113
    %1120 = vmatprep.subr.mxu0 0.0
    %1121 = vmatpush1.msra.mxu0 0.0
    %1122 = vmatprep.subr.mxu0 0.0
    %1123 = vmatpush1.msra.mxu0 0.0
    %1124 = vmatprep.subr.mxu0 0.0
    %1125 = vmatpush1.msra.mxu0 0.0
    %1126 = vmatprep.subr.mxu0 0.0
    %1127 = vmatpush1.msra.mxu0 0.0
    %1128 = vmatprep.subr.mxu0 0.0
    %1129 = vmatpush1.msra.mxu0 0.0
    %1130 = vmatprep.subr.mxu0 0.0
    %1131 = vmatpush1.msra.mxu0 0.0
    %1132 = vmatprep.subr.mxu0 0.0
    %1133 = vmatpush1.msra.mxu0 0.0
    %1134 = vmatprep.subr.mxu0 0.0
    %1135 = vmatpush1.msra.mxu0 0.0
    %1136 = vmatprep.subr.mxu0 0.0
    %1137 = vmatpush1.msra.mxu0 0.0
    %1138 = vmatprep.subr.mxu0 0.0
    %1139 = vmatpush1.msra.mxu0 0.0
    %1140 = vmatprep.subr.mxu0 0.0
    %1141 = vmatpush1.msra.mxu0 0.0
    %1142 = vmatprep.subr.mxu0 0.0
    %1143 = vmatpush1.msra.mxu0 0.0
    %1144 = vmatprep.subr.mxu0 0.0
    %1145 = vmatpush1.msra.mxu0 0.0
    %1146 = vmatprep.subr.mxu0 0.0
    %1147 = vmatpush1.msra.mxu0 0.0
    %1148 = vmatprep.subr.mxu0 0.0
    %1149 = vmatpush1.msra.mxu0 0.0
    %1150 = vmatprep.subr.mxu0 0.0
    %1151 = vmatpush1.msra.mxu0 0.0
    %1152 = vmatprep.subr.mxu0 0.0
    %1153 = vmatpush1.msra.mxu0 0.0
    %1154 = vmatprep.subr.mxu0 0.0
    %1155 = vmatpush1.msra.mxu0 0.0
    %1156 = vmatprep.subr.mxu0 0.0
    %1157 = vmatpush1.msra.mxu0 0.0
    %1158 = vmatprep.subr.mxu0 0.0
    %1159 = vmatpush1.msra.mxu0 0.0
    %1160 = vmatprep.subr.mxu0 0.0
    %1161 = vmatpush1.msra.mxu0 0.0
    %1162 = vmatprep.subr.mxu0 0.0
    %1163 = vmatpush1.msra.mxu0 0.0
    %1164 = vmatprep.subr.mxu0 0.0
    %1165 = vmatpush1.msra.mxu0 0.0
    %1166 = vmatprep.subr.mxu0 0.0
    %1167 = vmatpush1.msra.mxu0 0.0
    %1168 = vmatprep.subr.mxu0 0.0
    %1169 = vmatpush1.msra.mxu0 0.0
    %1170 = vmatprep.subr.mxu0 0.0
    %1171 = vmatpush1.msra.mxu0 0.0
    %1172 = vmatprep.subr.mxu0 0.0
    %1173 = vmatpush1.msra.mxu0 0.0
    %1174 = vmatprep.subr.mxu0 0.0
    %1175 = vmatpush1.msra.mxu0 0.0
    %1176 = vmatprep.subr.mxu0 0.0
    %1177 = vmatpush1.msra.mxu0 0.0
    %1178 = vmatprep.subr.mxu0 0.0
    %1179 = vmatpush1.msra.mxu0 0.0
    %1180 = vmatprep.subr.mxu0 0.0
    %1181 = vmatpush1.msra.mxu0 0.0
    %1182 = vmatprep.mubr.f32.mxu0 0.0
    %1183 = vmatmul.mubr.f32.gmra.mrb[0].mxu0 %v1116
    %v1184 = vpop.f32.mrb[0].mxu0
    %v1185 = vadd.f32 0.0, %v1184
    %v1186 = vpop.f32.mrb[0].mxu0
    %1187 = vdwg.mxu0
    %v1189 = vsel %vm454, %v1104, 0
    %1191 = vmatprep.subr.mxu0 0.0
    %1192 = vmatpush1.msra.mxu0 %v1114
    %1193 = vmatprep.subr.mxu0 0.0
    %1194 = vmatpush1.msra.mxu0 0.0
    %1195 = vmatprep.subr.mxu0 0.0
    %1196 = vmatpush1.msra.mxu0 0.0
    %1197 = vmatprep.subr.mxu0 0.0
    %1198 = vmatpush1.msra.mxu0 0.0
    %1199 = vmatprep.subr.mxu0 0.0
    %1200 = vmatpush1.msra.mxu0 0.0
    %1201 = vmatprep.subr.mxu0 0.0
    %1202 = vmatpush1.msra.mxu0 0.0
    %1203 = vmatprep.subr.mxu0 0.0
    %1204 = vmatpush1.msra.mxu0 0.0
    %1205 = vmatprep.subr.mxu0 0.0
    %1206 = vmatpush1.msra.mxu0 0.0
    %1207 = vmatprep.subr.mxu0 0.0
    %1208 = vmatpush1.msra.mxu0 0.0
    %1209 = vmatprep.subr.mxu0 0.0
    %1210 = vmatpush1.msra.mxu0 0.0
    %1211 = vmatprep.subr.mxu0 0.0
    %1212 = vmatpush1.msra.mxu0 0.0
    %1213 = vmatprep.subr.mxu0 0.0
    %1214 = vmatpush1.msra.mxu0 0.0
    %1215 = vmatprep.subr.mxu0 0.0
    %1216 = vmatpush1.msra.mxu0 0.0
    %1217 = vmatprep.subr.mxu0 0.0
    %1218 = vmatpush1.msra.mxu0 0.0
    %1219 = vmatprep.subr.mxu0 0.0
    %1220 = vmatpush1.msra.mxu0 0.0
    %1221 = vmatprep.subr.mxu0 0.0
    %1222 = vmatpush1.msra.mxu0 0.0
    %1223 = vmatprep.subr.mxu0 0.0
    %1224 = vmatpush1.msra.mxu0 0.0
    %1225 = vmatprep.subr.mxu0 0.0
    %1226 = vmatpush1.msra.mxu0 0.0
    %1227 = vmatprep.subr.mxu0 0.0
    %1228 = vmatpush1.msra.mxu0 0.0
    %1229 = vmatprep.subr.mxu0 0.0
    %1230 = vmatpush1.msra.mxu0 0.0
    %1231 = vmatprep.subr.mxu0 0.0
    %1232 = vmatpush1.msra.mxu0 0.0
    %1233 = vmatprep.subr.mxu0 0.0
    %1234 = vmatpush1.msra.mxu0 0.0
    %1235 = vmatprep.subr.mxu0 0.0
    %1236 = vmatpush1.msra.mxu0 0.0
    %1237 = vmatprep.subr.mxu0 0.0
    %1238 = vmatpush1.msra.mxu0 0.0
    %1239 = vmatprep.subr.mxu0 0.0
    %1240 = vmatpush1.msra.mxu0 0.0
    %1241 = vmatprep.subr.mxu0 0.0
    %1242 = vmatpush1.msra.mxu0 0.0
    %1243 = vmatprep.subr.mxu0 0.0
    %1244 = vmatpush1.msra.mxu0 0.0
    %1245 = vmatprep.subr.mxu0 0.0
    %1246 = vmatpush1.msra.mxu0 0.0
    %1247 = vmatprep.subr.mxu0 0.0
    %1248 = vmatpush1.msra.mxu0 0.0
    %1249 = vmatprep.subr.mxu0 0.0
    %1250 = vmatpush1.msra.mxu0 0.0
    %1251 = vmatprep.subr.mxu0 0.0
    %1252 = vmatpush1.msra.mxu0 0.0
    %1253 = vmatprep.subr.mxu0 0.0
    %1254 = vmatpush1.msra.mxu0 0.0
    %1255 = vmatprep.mubr.f32.mxu0 0.0
    %1256 = vmatmul.mubr.f32.gmra.mrb[0].mxu0 %v1189
    %v1257 = vpop.f32.mrb[0].mxu0
    %v1258 = vadd.f32 0.0, %v1257
    %v1259 = vpop.f32.mrb[0].mxu0
    %1260 = vdwg.mxu0
    %v1261 = vmul.f32 %v1185, %v1111
    %v1262 = vmul.f32 %v1258, %v1112
    %v1263 = vadd.f32 %v944, %v1261
    %v1264 = vadd.f32 %v945, %v1262
    %v1265 = vld [vmem:[%s6 + $0xd] sm:$0x1]
    %v1266 = vlaneseq
    %v1267 = vshrl.u32 %v1266, 7
    %v1268 = vsub.s32 0, %v1267
    %v1269 = vrot.slane %v1265, %v1268
    %v1270 = vmul.f32 %v298, %v1269
    %v1271 = vmul.f32 %v299, %v1269
    %1272 = vmatprep.subr.mxu0 0.0
    %1273 = vmatpush1.xpose.msra.mxu0 %v1270
    %1274 = vmatprep.subr.mxu0 0.0
    %1275 = vmatpush1.xpose.msra.mxu0 0.0
    %1276 = vmatprep.subr.mxu0 0.0
    %1277 = vmatpush1.xpose.msra.mxu0 0.0
    %1278 = vmatprep.subr.mxu0 0.0
    %1279 = vmatpush1.xpose.msra.mxu0 0.0
    %1280 = vmatprep.subr.mxu0 0.0
    %1281 = vmatpush1.xpose.msra.mxu0 0.0
    %1282 = vmatprep.subr.mxu0 0.0
    %1283 = vmatpush1.xpose.msra.mxu0 0.0
    %1284 = vmatprep.subr.mxu0 0.0
    %1285 = vmatpush1.xpose.msra.mxu0 0.0
    %1286 = vmatprep.subr.mxu0 0.0
    %1287 = vmatpush1.xpose.msra.mxu0 0.0
    %1288 = vmatprep.subr.mxu0 0.0
    %1289 = vmatpush1.xpose.msra.mxu0 0.0
    %1290 = vmatprep.subr.mxu0 0.0
    %1291 = vmatpush1.xpose.msra.mxu0 0.0
    %1292 = vmatprep.subr.mxu0 0.0
    %1293 = vmatpush1.xpose.msra.mxu0 0.0
    %1294 = vmatprep.subr.mxu0 0.0
    %1295 = vmatpush1.xpose.msra.mxu0 0.0
    %1296 = vmatprep.subr.mxu0 0.0
    %1297 = vmatpush1.xpose.msra.mxu0 0.0
    %1298 = vmatprep.subr.mxu0 0.0
    %1299 = vmatpush1.xpose.msra.mxu0 0.0
    %1300 = vmatprep.subr.mxu0 0.0
    %1301 = vmatpush1.xpose.msra.mxu0 0.0
    %1302 = vmatprep.subr.mxu0 0.0
    %1303 = vmatpush1.xpose.msra.mxu0 0.0
    %1304 = vmatprep.subr.mxu0 0.0
    %1305 = vmatpush1.xpose.msra.mxu0 0.0
    %1306 = vmatprep.subr.mxu0 0.0
    %1307 = vmatpush1.xpose.msra.mxu0 0.0
    %1308 = vmatprep.subr.mxu0 0.0
    %1309 = vmatpush1.xpose.msra.mxu0 0.0
    %1310 = vmatprep.subr.mxu0 0.0
    %1311 = vmatpush1.xpose.msra.mxu0 0.0
    %1312 = vmatprep.subr.mxu0 0.0
    %1313 = vmatpush1.xpose.msra.mxu0 0.0
    %1314 = vmatprep.subr.mxu0 0.0
    %1315 = vmatpush1.xpose.msra.mxu0 0.0
    %1316 = vmatprep.subr.mxu0 0.0
    %1317 = vmatpush1.xpose.msra.mxu0 0.0
    %1318 = vmatprep.subr.mxu0 0.0
    %1319 = vmatpush1.xpose.msra.mxu0 0.0
    %1320 = vmatprep.subr.mxu0 0.0
    %1321 = vmatpush1.xpose.msra.mxu0 0.0
    %1322 = vmatprep.subr.mxu0 0.0
    %1323 = vmatpush1.xpose.msra.mxu0 0.0
    %1324 = vmatprep.subr.mxu0 0.0
    %1325 = vmatpush1.xpose.msra.mxu0 0.0
    %1326 = vmatprep.subr.mxu0 0.0
    %1327 = vmatpush1.xpose.msra.mxu0 0.0
    %1328 = vmatprep.subr.mxu0 0.0
    %1329 = vmatpush1.xpose.msra.mxu0 0.0
    %1330 = vmatprep.subr.mxu0 0.0
    %1331 = vmatpush1.xpose.msra.mxu0 0.0
    %1332 = vmatprep.subr.mxu0 0.0
    %1333 = vmatpush1.xpose.msra.mxu0 0.0
    %1334 = vmatprep.subr.mxu0 0.0
    %1335 = vmatpush1.xpose.msra.mxu0 0.0
    %1336 = vmatprep.mubr.f32.mxu0 0.0
    %1337 = vmatmul.mubr.f32.gmra.mrb[0].mxu0 %v291
    %v1338 = vpop.f32.mrb[0].mxu0
    %v1339 = vadd.f32 %v84, %v1338
    %v1340 = vpop.f32.mrb[0].mxu0
    %1341 = vdwg.mxu0
    %1342 = vmatprep.subr.mxu0 0.0
    %1343 = vmatpush1.xpose.msra.mxu0 %v1271
    %1344 = vmatprep.subr.mxu0 0.0
    %1345 = vmatpush1.xpose.msra.mxu0 0.0
    %1346 = vmatprep.subr.mxu0 0.0
    %1347 = vmatpush1.xpose.msra.mxu0 0.0
    %1348 = vmatprep.subr.mxu0 0.0
    %1349 = vmatpush1.xpose.msra.mxu0 0.0
    %1350 = vmatprep.subr.mxu0 0.0
    %1351 = vmatpush1.xpose.msra.mxu0 0.0
    %1352 = vmatprep.subr.mxu0 0.0
    %1353 = vmatpush1.xpose.msra.mxu0 0.0
    %1354 = vmatprep.subr.mxu0 0.0
    %1355 = vmatpush1.xpose.msra.mxu0 0.0
    %1356 = vmatprep.subr.mxu0 0.0
    %1357 = vmatpush1.xpose.msra.mxu0 0.0
    %1358 = vmatprep.subr.mxu0 0.0
    %1359 = vmatpush1.xpose.msra.mxu0 0.0
    %1360 = vmatprep.subr.mxu0 0.0
    %1361 = vmatpush1.xpose.msra.mxu0 0.0
    %1362 = vmatprep.subr.mxu0 0.0
    %1363 = vmatpush1.xpose.msra.mxu0 0.0
    %1364 = vmatprep.subr.mxu0 0.0
    %1365 = vmatpush1.xpose.msra.mxu0 0.0
    %1366 = vmatprep.subr.mxu0 0.0
    %1367 = vmatpush1.xpose.msra.mxu0 0.0
    %1368 = vmatprep.subr.mxu0 0.0
    %1369 = vmatpush1.xpose.msra.mxu0 0.0
    %1370 = vmatprep.subr.mxu0 0.0
    %1371 = vmatpush1.xpose.msra.mxu0 0.0
    %1372 = vmatprep.subr.mxu0 0.0
    %1373 = vmatpush1.xpose.msra.mxu0 0.0
    %1374 = vmatprep.subr.mxu0 0.0
    %1375 = vmatpush1.xpose.msra.mxu0 0.0
    %1376 = vmatprep.subr.mxu0 0.0
    %1377 = vmatpush1.xpose.msra.mxu0 0.0
    %1378 = vmatprep.subr.mxu0 0.0
    %1379 = vmatpush1.xpose.msra.mxu0 0.0
    %1380 = vmatprep.subr.mxu0 0.0
    %1381 = vmatpush1.xpose.msra.mxu0 0.0
    %1382 = vmatprep.subr.mxu0 0.0
    %1383 = vmatpush1.xpose.msra.mxu0 0.0
    %1384 = vmatprep.subr.mxu0 0.0
    %1385 = vmatpush1.xpose.msra.mxu0 0.0
    %1386 = vmatprep.subr.mxu0 0.0
    %1387 = vmatpush1.xpose.msra.mxu0 0.0
    %1388 = vmatprep.subr.mxu0 0.0
    %1389 = vmatpush1.xpose.msra.mxu0 0.0
    %1390 = vmatprep.subr.mxu0 0.0
    %1391 = vmatpush1.xpose.msra.mxu0 0.0
    %1392 = vmatprep.subr.mxu0 0.0
    %1393 = vmatpush1.xpose.msra.mxu0 0.0
    %1394 = vmatprep.subr.mxu0 0.0
    %1395 = vmatpush1.xpose.msra.mxu0 0.0
    %1396 = vmatprep.subr.mxu0 0.0
    %1397 = vmatpush1.xpose.msra.mxu0 0.0
    %1398 = vmatprep.subr.mxu0 0.0
    %1399 = vmatpush1.xpose.msra.mxu0 0.0
    %1400 = vmatprep.subr.mxu0 0.0
    %1401 = vmatpush1.xpose.msra.mxu0 0.0
    %1402 = vmatprep.subr.mxu0 0.0
    %1403 = vmatpush1.xpose.msra.mxu0 0.0
    %1404 = vmatprep.subr.mxu0 0.0
    %1405 = vmatpush1.xpose.msra.mxu0 0.0
    %1406 = vmatprep.mubr.f32.mxu0 0.0
    %1407 = vmatmul.mubr.f32.gmra.mrb[0].mxu0 %v292
    %v1408 = vpop.f32.mrb[0].mxu0
    %v1409 = vadd.f32 %v85, %v1408
    %v1410 = vpop.f32.mrb[0].mxu0
    %1411 = vdwg.mxu0
    %v1412 = vsel %vm454, %v1339, -inf
    %1413 = vmax.xlane.f32.xlu0 %v1412
    %v1414 = vpop.xlane.xlu0 %1413
    %v1415 = vsel %vm454, %v1409, -inf
    %1416 = vmax.xlane.f32.xlu0 %v1415
    %v1417 = vpop.xlane.xlu0 %1416
    %v1418 = vsub.f32 %v1339, %v1414
    %v1419 = vsub.f32 %v1409, %v1417
    %v1420 = vmul.f32 %v1418, 1.442695
    %v1421 = vpow.pop %v1420
    %v1422 = vmul.f32 %v1419, 1.442695
    %v1423 = vpow.pop %v1422
    %v1424 = vsel %vm454, %v1421, 0.0
    %1425 = vadd.xlane.f32.xlu0 %v1424
    %v1426 = vpop.xlane.xlu0 %1425
    %v1427 = vsel %vm454, %v1423, 0.0
    %1428 = vadd.xlane.f32.xlu0 %v1427
    %v1429 = vpop.xlane.xlu0 %1428
    %v1430 = vrcp.pop %v1426
    %v1431 = vrcp.pop %v1429
    %v1432 = vmul.f32 %v305, %v1269
    %v1433 = vmul.f32 %v306, %v1269
    %v1435 = vsel %vm454, %v1421, 0
    %1437 = vmatprep.subr.mxu0 0.0
    %1438 = vmatpush1.msra.mxu0 %v1432
    %1439 = vmatprep.subr.mxu0 0.0
    %1440 = vmatpush1.msra.mxu0 0.0
    %1441 = vmatprep.subr.mxu0 0.0
    %1442 = vmatpush1.msra.mxu0 0.0
    %1443 = vmatprep.subr.mxu0 0.0
    %1444 = vmatpush1.msra.mxu0 0.0
    %1445 = vmatprep.subr.mxu0 0.0
    %1446 = vmatpush1.msra.mxu0 0.0
    %1447 = vmatprep.subr.mxu0 0.0
    %1448 = vmatpush1.msra.mxu0 0.0
    %1449 = vmatprep.subr.mxu0 0.0
    %1450 = vmatpush1.msra.mxu0 0.0
    %1451 = vmatprep.subr.mxu0 0.0
    %1452 = vmatpush1.msra.mxu0 0.0
    %1453 = vmatprep.subr.mxu0 0.0
    %1454 = vmatpush1.msra.mxu0 0.0
    %1455 = vmatprep.subr.mxu0 0.0
    %1456 = vmatpush1.msra.mxu0 0.0
    %1457 = vmatprep.subr.mxu0 0.0
    %1458 = vmatpush1.msra.mxu0 0.0
    %1459 = vmatprep.subr.mxu0 0.0
    %1460 = vmatpush1.msra.mxu0 0.0
    %1461 = vmatprep.subr.mxu0 0.0
    %1462 = vmatpush1.msra.mxu0 0.0
    %1463 = vmatprep.subr.mxu0 0.0
    %1464 = vmatpush1.msra.mxu0 0.0
    %1465 = vmatprep.subr.mxu0 0.0
    %1466 = vmatpush1.msra.mxu0 0.0
    %1467 = vmatprep.subr.mxu0 0.0
    %1468 = vmatpush1.msra.mxu0 0.0
    %1469 = vmatprep.subr.mxu0 0.0
    %1470 = vmatpush1.msra.mxu0 0.0
    %1471 = vmatprep.subr.mxu0 0.0
    %1472 = vmatpush1.msra.mxu0 0.0
    %1473 = vmatprep.subr.mxu0 0.0
    %1474 = vmatpush1.msra.mxu0 0.0
    %1475 = vmatprep.subr.mxu0 0.0
    %1476 = vmatpush1.msra.mxu0 0.0
    %1477 = vmatprep.subr.mxu0 0.0
    %1478 = vmatpush1.msra.mxu0 0.0
    %1479 = vmatprep.subr.mxu0 0.0
    %1480 = vmatpush1.msra.mxu0 0.0
    %1481 = vmatprep.subr.mxu0 0.0
    %1482 = vmatpush1.msra.mxu0 0.0
    %1483 = vmatprep.subr.mxu0 0.0
    %1484 = vmatpush1.msra.mxu0 0.0
    %1485 = vmatprep.subr.mxu0 0.0
    %1486 = vmatpush1.msra.mxu0 0.0
    %1487 = vmatprep.subr.mxu0 0.0
    %1488 = vmatpush1.msra.mxu0 0.0
    %1489 = vmatprep.subr.mxu0 0.0
    %1490 = vmatpush1.msra.mxu0 0.0
    %1491 = vmatprep.subr.mxu0 0.0
    %1492 = vmatpush1.msra.mxu0 0.0
    %1493 = vmatprep.subr.mxu0 0.0
    %1494 = vmatpush1.msra.mxu0 0.0
    %1495 = vmatprep.subr.mxu0 0.0
    %1496 = vmatpush1.msra.mxu0 0.0
    %1497 = vmatprep.subr.mxu0 0.0
    %1498 = vmatpush1.msra.mxu0 0.0
    %1499 = vmatprep.subr.mxu0 0.0
    %1500 = vmatpush1.msra.mxu0 0.0
    %1501 = vmatprep.mubr.f32.mxu0 0.0
    %1502 = vmatmul.mubr.f32.gmra.mrb[0].mxu0 %v1435
    %v1503 = vpop.f32.mrb[0].mxu0
    %v1504 = vadd.f32 0.0, %v1503
    %v1505 = vpop.f32.mrb[0].mxu0
    %1506 = vdwg.mxu0
    %v1508 = vsel %vm454, %v1423, 0
    %1510 = vmatprep.subr.mxu0 0.0
    %1511 = vmatpush1.msra.mxu0 %v1433
    %1512 = vmatprep.subr.mxu0 0.0
    %1513 = vmatpush1.msra.mxu0 0.0
    %1514 = vmatprep.subr.mxu0 0.0
    %1515 = vmatpush1.msra.mxu0 0.0
    %1516 = vmatprep.subr.mxu0 0.0
    %1517 = vmatpush1.msra.mxu0 0.0
    %1518 = vmatprep.subr.mxu0 0.0
    %1519 = vmatpush1.msra.mxu0 0.0
    %1520 = vmatprep.subr.mxu0 0.0
    %1521 = vmatpush1.msra.mxu0 0.0
    %1522 = vmatprep.subr.mxu0 0.0
    %1523 = vmatpush1.msra.mxu0 0.0
    %1524 = vmatprep.subr.mxu0 0.0
    %1525 = vmatpush1.msra.mxu0 0.0
    %1526 = vmatprep.subr.mxu0 0.0
    %1527 = vmatpush1.msra.mxu0 0.0
    %1528 = vmatprep.subr.mxu0 0.0
    %1529 = vmatpush1.msra.mxu0 0.0
    %1530 = vmatprep.subr.mxu0 0.0
    %1531 = vmatpush1.msra.mxu0 0.0
    %1532 = vmatprep.subr.mxu0 0.0
    %1533 = vmatpush1.msra.mxu0 0.0
    %1534 = vmatprep.subr.mxu0 0.0
    %1535 = vmatpush1.msra.mxu0 0.0
    %1536 = vmatprep.subr.mxu0 0.0
    %1537 = vmatpush1.msra.mxu0 0.0
    %1538 = vmatprep.subr.mxu0 0.0
    %1539 = vmatpush1.msra.mxu0 0.0
    %1540 = vmatprep.subr.mxu0 0.0
    %1541 = vmatpush1.msra.mxu0 0.0
    %1542 = vmatprep.subr.mxu0 0.0
    %1543 = vmatpush1.msra.mxu0 0.0
    %1544 = vmatprep.subr.mxu0 0.0
    %1545 = vmatpush1.msra.mxu0 0.0
    %1546 = vmatprep.subr.mxu0 0.0
    %1547 = vmatpush1.msra.mxu0 0.0
    %1548 = vmatprep.subr.mxu0 0.0
    %1549 = vmatpush1.msra.mxu0 0.0
    %1550 = vmatprep.subr.mxu0 0.0
    %1551 = vmatpush1.msra.mxu0 0.0
    %1552 = vmatprep.subr.mxu0 0.0
    %1553 = vmatpush1.msra.mxu0 0.0
    %1554 = vmatprep.subr.mxu0 0.0
    %1555 = vmatpush1.msra.mxu0 0.0
    %1556 = vmatprep.subr.mxu0 0.0
    %1557 = vmatpush1.msra.mxu0 0.0
    %1558 = vmatprep.subr.mxu0 0.0
    %1559 = vmatpush1.msra.mxu0 0.0
    %1560 = vmatprep.subr.mxu0 0.0
    %1561 = vmatpush1.msra.mxu0 0.0
    %1562 = vmatprep.subr.mxu0 0.0
    %1563 = vmatpush1.msra.mxu0 0.0
    %1564 = vmatprep.subr.mxu0 0.0
    %1565 = vmatpush1.msra.mxu0 0.0
    %1566 = vmatprep.subr.mxu0 0.0
    %1567 = vmatpush1.msra.mxu0 0.0
    %1568 = vmatprep.subr.mxu0 0.0
    %1569 = vmatpush1.msra.mxu0 0.0
    %1570 = vmatprep.subr.mxu0 0.0
    %1571 = vmatpush1.msra.mxu0 0.0
    %1572 = vmatprep.subr.mxu0 0.0
    %1573 = vmatpush1.msra.mxu0 0.0
    %1574 = vmatprep.mubr.f32.mxu0 0.0
    %1575 = vmatmul.mubr.f32.gmra.mrb[0].mxu0 %v1508
    %v1576 = vpop.f32.mrb[0].mxu0
    %v1577 = vadd.f32 0.0, %v1576
    %v1578 = vpop.f32.mrb[0].mxu0
    %1579 = vdwg.mxu0
    %v1580 = vmul.f32 %v1504, %v1430
    %v1581 = vmul.f32 %v1577, %v1431
    %v1582 = vadd.f32 %v1263, %v1580
    %v1583 = vadd.f32 %v1264, %v1581
    %v1584 = vld [vmem:[#allocation5] sm:$0xff]
    %v1585 = vld [vmem:[#allocation5 + $0x8] sm:$0xff]
    %v1586 = vld [vmem:[#allocation5 + $0x10] sm:$0xff]
    %v1587 = vld [vmem:[#allocation5 + $0x18] sm:$0xff]
    %v1588 = vld [vmem:[#allocation5 + $0x20] sm:$0xff]
    %v1589 = vld [vmem:[#allocation5 + $0x28] sm:$0xff]
    %v1590 = vld [vmem:[#allocation5 + $0x30] sm:$0xff]
    %v1591 = vld [vmem:[#allocation5 + $0x38] sm:$0xff]
    %v1592 = vld [vmem:[#allocation5 + $0x40] sm:$0xff]
    %v1593 = vld [vmem:[#allocation5 + $0x48] sm:$0xff]
    %v1594 = vld [vmem:[#allocation5 + $0x50] sm:$0xff]
    %v1595 = vld [vmem:[#allocation5 + $0x58] sm:$0xff]
    %v1596 = vld [vmem:[#allocation5 + $0x60] sm:$0xff]
    %v1597 = vld [vmem:[#allocation5 + $0x68] sm:$0xff]
    %v1598 = vld [vmem:[#allocation5 + $0x70] sm:$0xff]
    %v1599 = vld [vmem:[#allocation5 + $0x78] sm:$0xff]
    %v1600 = vld [vmem:[%s6 + $0x3] sm:$0x1]
    %v1601 = vlaneseq
    %v1602 = vshrl.u32 %v1601, 7
    %v1603 = vsub.s32 0, %v1602
    %v1604 = vrot.slane %v1600, %v1603
    %1605 = vmatprep.subr.mxu0 0.0
    %1606 = vmatpush1.msra.mxu0 %v1584
    %1607 = vmatprep.subr.mxu0 0.0
    %1608 = vmatpush1.msra.mxu0 %v1585
    %1609 = vmatprep.subr.mxu0 0.0
    %1610 = vmatpush1.msra.mxu0 %v1586
    %1611 = vmatprep.subr.mxu0 0.0
    %1612 = vmatpush1.msra.mxu0 %v1587
    %1613 = vmatprep.subr.mxu0 0.0
    %1614 = vmatpush1.msra.mxu0 %v1588
    %1615 = vmatprep.subr.mxu0 0.0
    %1616 = vmatpush1.msra.mxu0 %v1589
    %1617 = vmatprep.subr.mxu0 0.0
    %1618 = vmatpush1.msra.mxu0 %v1590
    %1619 = vmatprep.subr.mxu0 0.0
    %1620 = vmatpush1.msra.mxu0 %v1591
    %1621 = vmatprep.subr.mxu0 0.0
    %1622 = vmatpush1.msra.mxu0 %v1592
    %1623 = vmatprep.subr.mxu0 0.0
    %1624 = vmatpush1.msra.mxu0 %v1593
    %1625 = vmatprep.subr.mxu0 0.0
    %1626 = vmatpush1.msra.mxu0 %v1594
    %1627 = vmatprep.subr.mxu0 0.0
    %1628 = vmatpush1.msra.mxu0 %v1595
    %1629 = vmatprep.subr.mxu0 0.0
    %1630 = vmatpush1.msra.mxu0 %v1596
    %1631 = vmatprep.subr.mxu0 0.0
    %1632 = vmatpush1.msra.mxu0 %v1597
    %1633 = vmatprep.subr.mxu0 0.0
    %1634 = vmatpush1.msra.mxu0 %v1598
    %1635 = vmatprep.subr.mxu0 0.0
    %1636 = vmatpush1.msra.mxu0 %v1599
    %1637 = vmatprep.subr.mxu0 0.0
    %1638 = vmatpush1.msra.mxu0 0.0
    %1639 = vmatprep.subr.mxu0 0.0
    %1640 = vmatpush1.msra.mxu0 0.0
    %1641 = vmatprep.subr.mxu0 0.0
    %1642 = vmatpush1.msra.mxu0 0.0
    %1643 = vmatprep.subr.mxu0 0.0
    %1644 = vmatpush1.msra.mxu0 0.0
    %1645 = vmatprep.subr.mxu0 0.0
    %1646 = vmatpush1.msra.mxu0 0.0
    %1647 = vmatprep.subr.mxu0 0.0
    %1648 = vmatpush1.msra.mxu0 0.0
    %1649 = vmatprep.subr.mxu0 0.0
    %1650 = vmatpush1.msra.mxu0 0.0
    %1651 = vmatprep.subr.mxu0 0.0
    %1652 = vmatpush1.msra.mxu0 0.0
    %1653 = vmatprep.subr.mxu0 0.0
    %1654 = vmatpush1.msra.mxu0 0.0
    %1655 = vmatprep.subr.mxu0 0.0
    %1656 = vmatpush1.msra.mxu0 0.0
    %1657 = vmatprep.subr.mxu0 0.0
    %1658 = vmatpush1.msra.mxu0 0.0
    %1659 = vmatprep.subr.mxu0 0.0
    %1660 = vmatpush1.msra.mxu0 0.0
    %1661 = vmatprep.subr.mxu0 0.0
    %1662 = vmatpush1.msra.mxu0 0.0
    %1663 = vmatprep.subr.mxu0 0.0
    %1664 = vmatpush1.msra.mxu0 0.0
    %1665 = vmatprep.subr.mxu0 0.0
    %1666 = vmatpush1.msra.mxu0 0.0
    %1667 = vmatprep.subr.mxu0 0.0
    %1668 = vmatpush1.msra.mxu0 0.0
    %1669 = vmatprep.mubr.f32.mxu0 0.0
    %1670 = vmatmul.mubr.f32.gmra.mrb[0].mxu0 %v1582
    %v1671 = vpop.f32.mrb[0].mxu0
    %v1672 = vadd.f32 %v1604, %v1671
    %v1673 = vpop.f32.mrb[0].mxu0
    %1674 = vmatprep.mubr.f32.mxu0 0.0
    %1675 = vmatmul.mubr.f32.gmra.mrb[0].mxu0 %v1583
    %v1676 = vpop.f32.mrb[0].mxu0
    %v1677 = vadd.f32 %v1604, %v1676
    %v1678 = vpop.f32.mrb[0].mxu0
    %1679 = vdwg.mxu0
    %v1680 = vadd.f32 %v1672, %v82
    %v1681 = vadd.f32 %v1677, %v83
    %v1682 = vld [vmem:[%s6 + $0x4] sm:$0x1]
    %v1683 = vld [vmem:[%s6 + $0x5] sm:$0x1]
    %1684 = vadd.xlane.f32.xlu0 %v1680
    %v1685 = vpop.xlane.xlu0 %1684
    %1686 = vadd.xlane.f32.xlu0 %v1681
    %v1687 = vpop.xlane.xlu0 %1686
    %v1688 = vmul.f32 %v1680, %v1680
    %v1689 = vmul.f32 %v1681, %v1681
    %1690 = vadd.xlane.f32.xlu0 %v1688
    %v1691 = vpop.xlane.xlu0 %1690
    %1692 = vadd.xlane.f32.xlu0 %v1689
    %v1693 = vpop.xlane.xlu0 %1692
    %v1694 = vmul.f32 %v1685, 0.03125
    %v1695 = vmul.f32 %v1687, 0.03125
    %v1696 = vmul.f32 %v1691, 0.03125
    %v1697 = vmul.f32 %v1693, 0.03125
    %v1698 = vmul.f32 %v1694, %v1694
    %v1699 = vmul.f32 %v1695, %v1695
    %v1700 = vsub.f32 %v1696, %v1698
    %v1701 = vsub.f32 %v1697, %v1699
    %v1702 = vmax.f32 %v1700, 0.0
    %v1703 = vmax.f32 %v1701, 0.0
    %v1704 = vadd.f32 %v1702, 1e-12
    %v1705 = vadd.f32 %v1703, 1e-12
    %v1706 = vrsqrt.pop %v1704
    %v1707 = vrsqrt.pop %v1705
    %v1708 = vsub.f32 %v1680, %v1694
    %v1709 = vsub.f32 %v1681, %v1695
    %v1710 = vmul.f32 %v1708, %v1706
    %v1711 = vmul.f32 %v1709, %v1707
    %v1712 = vlaneseq
    %v1713 = vshrl.u32 %v1712, 7
    %v1714 = vsub.s32 0, %v1713
    %v1715 = vrot.slane %v1682, %v1714
    %v1716 = vmul.f32 %v1710, %v1715
    %v1717 = vmul.f32 %v1711, %v1715
    %v1718 = vlaneseq
    %v1719 = vshrl.u32 %v1718, 7
    %v1720 = vsub.s32 0, %v1719
    %v1721 = vrot.slane %v1683, %v1720
    %v1722 = vadd.f32 %v1716, %v1721
    %v1723 = vadd.f32 %v1717, %v1721
    %v1724 = vld [vmem:[#allocation7] sm:$0xff]
    %v1725 = vld [vmem:[#allocation7 + $0x8] sm:$0xff]
    %v1726 = vld [vmem:[#allocation7 + $0x10] sm:$0xff]
    %v1727 = vld [vmem:[#allocation7 + $0x18] sm:$0xff]
    %v1728 = vld [vmem:[#allocation7 + $0x20] sm:$0xff]
    %v1729 = vld [vmem:[#allocation7 + $0x28] sm:$0xff]
    %v1730 = vld [vmem:[#allocation7 + $0x30] sm:$0xff]
    %v1731 = vld [vmem:[#allocation7 + $0x38] sm:$0xff]
    %v1732 = vld [vmem:[#allocation7 + $0x40] sm:$0xff]
    %v1733 = vld [vmem:[#allocation7 + $0x48] sm:$0xff]
    %v1734 = vld [vmem:[#allocation7 + $0x50] sm:$0xff]
    %v1735 = vld [vmem:[#allocation7 + $0x58] sm:$0xff]
    %v1736 = vld [vmem:[#allocation7 + $0x60] sm:$0xff]
    %v1737 = vld [vmem:[#allocation7 + $0x68] sm:$0xff]
    %v1738 = vld [vmem:[#allocation7 + $0x70] sm:$0xff]
    %v1739 = vld [vmem:[#allocation7 + $0x78] sm:$0xff]
    %v1740 = vld [vmem:[%s6 + $0x6] sm:$0x1]
    %v1741 = vlaneseq
    %v1742 = vshrl.u32 %v1741, 7
    %v1743 = vsub.s32 0, %v1742
    %v1744 = vrot.slane %v1740, %v1743
    %1745 = vmatprep.subr.mxu0 0.0
    %1746 = vmatpush1.msra.mxu0 %v1724
    %1747 = vmatprep.subr.mxu0 0.0
    %1748 = vmatpush1.msra.mxu0 %v1725
    %1749 = vmatprep.subr.mxu0 0.0
    %1750 = vmatpush1.msra.mxu0 %v1726
    %1751 = vmatprep.subr.mxu0 0.0
    %1752 = vmatpush1.msra.mxu0 %v1727
    %1753 = vmatprep.subr.mxu0 0.0
    %1754 = vmatpush1.msra.mxu0 %v1728
    %1755 = vmatprep.subr.mxu0 0.0
    %1756 = vmatpush1.msra.mxu0 %v1729
    %1757 = vmatprep.subr.mxu0 0.0
    %1758 = vmatpush1.msra.mxu0 %v1730
    %1759 = vmatprep.subr.mxu0 0.0
    %1760 = vmatpush1.msra.mxu0 %v1731
    %1761 = vmatprep.subr.mxu0 0.0
    %1762 = vmatpush1.msra.mxu0 %v1732
    %1763 = vmatprep.subr.mxu0 0.0
    %1764 = vmatpush1.msra.mxu0 %v1733
    %1765 = vmatprep.subr.mxu0 0.0
    %1766 = vmatpush1.msra.mxu0 %v1734
    %1767 = vmatprep.subr.mxu0 0.0
    %1768 = vmatpush1.msra.mxu0 %v1735
    %1769 = vmatprep.subr.mxu0 0.0
    %1770 = vmatpush1.msra.mxu0 %v1736
    %1771 = vmatprep.subr.mxu0 0.0
    %1772 = vmatpush1.msra.mxu0 %v1737
    %1773 = vmatprep.subr.mxu0 0.0
    %1774 = vmatpush1.msra.mxu0 %v1738
    %1775 = vmatprep.subr.mxu0 0.0
    %1776 = vmatpush1.msra.mxu0 %v1739
    %1777 = vmatprep.subr.mxu0 0.0
    %1778 = vmatpush1.msra.mxu0 0.0
    %1779 = vmatprep.subr.mxu0 0.0
    %1780 = vmatpush1.msra.mxu0 0.0
    %1781 = vmatprep.subr.mxu0 0.0
    %1782 = vmatpush1.msra.mxu0 0.0
    %1783 = vmatprep.subr.mxu0 0.0
    %1784 = vmatpush1.msra.mxu0 0.0
    %1785 = vmatprep.subr.mxu0 0.0
    %1786 = vmatpush1.msra.mxu0 0.0
    %1787 = vmatprep.subr.mxu0 0.0
    %1788 = vmatpush1.msra.mxu0 0.0
    %1789 = vmatprep.subr.mxu0 0.0
    %1790 = vmatpush1.msra.mxu0 0.0
    %1791 = vmatprep.subr.mxu0 0.0
    %1792 = vmatpush1.msra.mxu0 0.0
    %1793 = vmatprep.subr.mxu0 0.0
    %1794 = vmatpush1.msra.mxu0 0.0
    %1795 = vmatprep.subr.mxu0 0.0
    %1796 = vmatpush1.msra.mxu0 0.0
    %1797 = vmatprep.subr.mxu0 0.0
    %1798 = vmatpush1.msra.mxu0 0.0
    %1799 = vmatprep.subr.mxu0 0.0
    %1800 = vmatpush1.msra.mxu0 0.0
    %1801 = vmatprep.subr.mxu0 0.0
    %1802 = vmatpush1.msra.mxu0 0.0
    %1803 = vmatprep.subr.mxu0 0.0
    %1804 = vmatpush1.msra.mxu0 0.0
    %1805 = vmatprep.subr.mxu0 0.0
    %1806 = vmatpush1.msra.mxu0 0.0
    %1807 = vmatprep.subr.mxu0 0.0
    %1808 = vmatpush1.msra.mxu0 0.0
    %1809 = vmatprep.mubr.f32.mxu0 0.0
    %1810 = vmatmul.mubr.f32.gmra.mrb[0].mxu0 %v1722
    %v1811 = vpop.f32.mrb[0].mxu0
    %v1812 = vadd.f32 %v1744, %v1811
    %v1813 = vpop.f32.mrb[0].mxu0
    %1814 = vmatprep.mubr.f32.mxu0 0.0
    %1815 = vmatmul.mubr.f32.gmra.mrb[0].mxu0 %v1723
    %v1816 = vpop.f32.mrb[0].mxu0
    %v1817 = vadd.f32 %v1744, %v1816
    %v1818 = vpop.f32.mrb[0].mxu0
    %1819 = vdwg.mxu0
    %v1820 = vmax.f32 %v1812, 0.0
    %v1821 = vmax.f32 %v1817, 0.0
    %v1822 = vld [vmem:[#allocation8] sm:$0xff]
    %v1823 = vld [vmem:[#allocation8 + $0x8] sm:$0xff]
    %v1824 = vld [vmem:[#allocation8 + $0x10] sm:$0xff]
    %v1825 = vld [vmem:[#allocation8 + $0x18] sm:$0xff]
    %v1826 = vld [vmem:[#allocation8 + $0x20] sm:$0xff]
    %v1827 = vld [vmem:[#allocation8 + $0x28] sm:$0xff]
    %v1828 = vld [vmem:[#allocation8 + $0x30] sm:$0xff]
    %v1829 = vld [vmem:[#allocation8 + $0x38] sm:$0xff]
    %v1830 = vld [vmem:[#allocation8 + $0x40] sm:$0xff]
    %v1831 = vld [vmem:[#allocation8 + $0x48] sm:$0xff]
    %v1832 = vld [vmem:[#allocation8 + $0x50] sm:$0xff]
    %v1833 = vld [vmem:[#allocation8 + $0x58] sm:$0xff]
    %v1834 = vld [vmem:[#allocation8 + $0x60] sm:$0xff]
    %v1835 = vld [vmem:[#allocation8 + $0x68] sm:$0xff]
    %v1836 = vld [vmem:[#allocation8 + $0x70] sm:$0xff]
    %v1837 = vld [vmem:[#allocation8 + $0x78] sm:$0xff]
    %v1838 = vld [vmem:[%s6 + $0x7] sm:$0x1]
    %v1839 = vlaneseq
    %v1840 = vshrl.u32 %v1839, 7
    %v1841 = vsub.s32 0, %v1840
    %v1842 = vrot.slane %v1838, %v1841
    %1843 = vmatprep.subr.mxu0 0.0
    %1844 = vmatpush1.msra.mxu0 %v1822
    %1845 = vmatprep.subr.mxu0 0.0
    %1846 = vmatpush1.msra.mxu0 %v1823
    %1847 = vmatprep.subr.mxu0 0.0
    %1848 = vmatpush1.msra.mxu0 %v1824
    %1849 = vmatprep.subr.mxu0 0.0
    %1850 = vmatpush1.msra.mxu0 %v1825
    %1851 = vmatprep.subr.mxu0 0.0
    %1852 = vmatpush1.msra.mxu0 %v1826
    %1853 = vmatprep.subr.mxu0 0.0
    %1854 = vmatpush1.msra.mxu0 %v1827
    %1855 = vmatprep.subr.mxu0 0.0
    %1856 = vmatpush1.msra.mxu0 %v1828
    %1857 = vmatprep.subr.mxu0 0.0
    %1858 = vmatpush1.msra.mxu0 %v1829
    %1859 = vmatprep.subr.mxu0 0.0
    %1860 = vmatpush1.msra.mxu0 %v1830
    %1861 = vmatprep.subr.mxu0 0.0
    %1862 = vmatpush1.msra.mxu0 %v1831
    %1863 = vmatprep.subr.mxu0 0.0
    %1864 = vmatpush1.msra.mxu0 %v1832
    %1865 = vmatprep.subr.mxu0 0.0
    %1866 = vmatpush1.msra.mxu0 %v1833
    %1867 = vmatprep.subr.mxu0 0.0
    %1868 = vmatpush1.msra.mxu0 %v1834
    %1869 = vmatprep.subr.mxu0 0.0
    %1870 = vmatpush1.msra.mxu0 %v1835
    %1871 = vmatprep.subr.mxu0 0.0
    %1872 = vmatpush1.msra.mxu0 %v1836
    %1873 = vmatprep.subr.mxu0 0.0
    %1874 = vmatpush1.msra.mxu0 %v1837
    %1875 = vmatprep.subr.mxu0 0.0
    %1876 = vmatpush1.msra.mxu0 0.0
    %1877 = vmatprep.subr.mxu0 0.0
    %1878 = vmatpush1.msra.mxu0 0.0
    %1879 = vmatprep.subr.mxu0 0.0
    %1880 = vmatpush1.msra.mxu0 0.0
    %1881 = vmatprep.subr.mxu0 0.0
    %1882 = vmatpush1.msra.mxu0 0.0
    %1883 = vmatprep.subr.mxu0 0.0
    %1884 = vmatpush1.msra.mxu0 0.0
    %1885 = vmatprep.subr.mxu0 0.0
    %1886 = vmatpush1.msra.mxu0 0.0
    %1887 = vmatprep.subr.mxu0 0.0
    %1888 = vmatpush1.msra.mxu0 0.0
    %1889 = vmatprep.subr.mxu0 0.0
    %1890 = vmatpush1.msra.mxu0 0.0
    %1891 = vmatprep.subr.mxu0 0.0
    %1892 = vmatpush1.msra.mxu0 0.0
    %1893 = vmatprep.subr.mxu0 0.0
    %1894 = vmatpush1.msra.mxu0 0.0
    %1895 = vmatprep.subr.mxu0 0.0
    %1896 = vmatpush1.msra.mxu0 0.0
    %1897 = vmatprep.subr.mxu0 0.0
    %1898 = vmatpush1.msra.mxu0 0.0
    %1899 = vmatprep.subr.mxu0 0.0
    %1900 = vmatpush1.msra.mxu0 0.0
    %1901 = vmatprep.subr.mxu0 0.0
    %1902 = vmatpush1.msra.mxu0 0.0
    %1903 = vmatprep.subr.mxu0 0.0
    %1904 = vmatpush1.msra.mxu0 0.0
    %1905 = vmatprep.subr.mxu0 0.0
    %1906 = vmatpush1.msra.mxu0 0.0
    %1907 = vmatprep.mubr.f32.mxu0 0.0
    %1908 = vmatmul.mubr.f32.gmra.mrb[0].mxu0 %v1820
    %v1909 = vpop.f32.mrb[0].mxu0
    %v1910 = vadd.f32 %v1842, %v1909
    %v1911 = vpop.f32.mrb[0].mxu0
    %1912 = vmatprep.mubr.f32.mxu0 0.0
    %1913 = vmatmul.mubr.f32.gmra.mrb[0].mxu0 %v1821
    %v1914 = vpop.f32.mrb[0].mxu0
    %v1915 = vadd.f32 %v1842, %v1914
    %v1916 = vpop.f32.mrb[0].mxu0
    %1917 = vdwg.mxu0
    %v1918 = vadd.f32 %v1910, %v1722
    %v1919 = vadd.f32 %v1915, %v1723
    %v1920 = vld [vmem:[%s6 + $0x8] sm:$0x1]
    %v1921 = vld [vmem:[%s6 + $0x9] sm:$0x1]
    %1922 = vadd.xlane.f32.xlu0 %v1918
    %v1923 = vpop.xlane.xlu0 %1922
    %1924 = vadd.xlane.f32.xlu0 %v1919
    %v1925 = vpop.xlane.xlu0 %1924
    %v1926 = vmul.f32 %v1918, %v1918
    %v1927 = vmul.f32 %v1919, %v1919
    %1928 = vadd.xlane.f32.xlu0 %v1926
    %v1929 = vpop.xlane.xlu0 %1928
    %1930 = vadd.xlane.f32.xlu0 %v1927
    %v1931 = vpop.xlane.xlu0 %1930
    %v1932 = vmul.f32 %v1923, 0.03125
    %v1933 = vmul.f32 %v1925, 0.03125
    %v1934 = vmul.f32 %v1929, 0.03125
    %v1935 = vmul.f32 %v1931, 0.03125
    %v1936 = vmul.f32 %v1932, %v1932
    %v1937 = vmul.f32 %v1933, %v1933
    %v1938 = vsub.f32 %v1934, %v1936
    %v1939 = vsub.f32 %v1935, %v1937
    %v1940 = vmax.f32 %v1938, 0.0
    %v1941 = vmax.f32 %v1939, 0.0
    %v1942 = vadd.f32 %v1940, 1e-12
    %v1943 = vadd.f32 %v1941, 1e-12
    %v1944 = vrsqrt.pop %v1942
    %v1945 = vrsqrt.pop %v1943
    %v1946 = vsub.f32 %v1918, %v1932
    %v1947 = vsub.f32 %v1919, %v1933
    %v1948 = vmul.f32 %v1946, %v1944
    %v1949 = vmul.f32 %v1947, %v1945
    %v1950 = vlaneseq
    %v1951 = vshrl.u32 %v1950, 7
    %v1952 = vsub.s32 0, %v1951
    %v1953 = vrot.slane %v1920, %v1952
    %v1954 = vmul.f32 %v1948, %v1953
    %v1955 = vmul.f32 %v1949, %v1953
    %v1956 = vlaneseq
    %v1957 = vshrl.u32 %v1956, 7
    %v1958 = vsub.s32 0, %v1957
    %v1959 = vrot.slane %v1921, %v1958
    %v1960 = vadd.f32 %v1954, %v1959
    %v1961 = vadd.f32 %v1955, %v1959
    %1962 = vst [vmem:[#allocation10] sm:$0xff] %v1960
    %1963 = vst [vmem:[#allocation10 + $0x8] sm:$0xff] %v1961
    // Predicated region
    $region46: #{tpu_custom_call.1} parent=1 // pred_check
      _
    $region47: #{tpu_custom_call.1} parent=1 // pred_check_branch
      %1965 = sbr.rel (0) target = $region49
    $region48: #{tpu_custom_call.1} parent=1 // pred_region
      %s1967 = ssub.s32 256, 256
      %1968 = vsyncadd [#allocation4], %s1967
      %s1969 = sshll.u32 [#allocation10], 4
      %s1970 = int_to_ptr.vmem [resolvable:$true] %s1969
      %1975 = dma.vmem_to_hbm [thread:$0]  %s1970, 256, %s7, [#allocation4], 128, 128, 8
    $region49: #{tpu_custom_call.1} parent=1 // pred_fallthru
      _
    // Predicated region
    $region50: #{tpu_custom_call.1} parent=1 // pred_check
      _
    $region51: #{tpu_custom_call.1} parent=1 // pred_check_branch
      %1977 = sbr.rel (0) target = $region53
    $region52: #{tpu_custom_call.1} parent=1 // pred_region
      %1978 = dma.done [#allocation4], 256
    $region53: #{tpu_custom_call.1} parent=1 // pred_fallthru
      _
    %1979 = vsyncpa [#allocation3], 1
    %1980 = vsyncpa [#allocation6], 1
    %1981 = vsyncpa [#allocation9], 1
    %1982 = vsyncpa [#allocation4], 1

</llo_original>
